<compile_context>
chip_gen: v5e
topology: v5e:2x2
jax: 0.10.0
libtpu: 0.0.40
codegen_flags: <defaults>
</compile_context>

<pallas_src>
import jax
import jax.numpy as jnp
from jax import lax
from jax.experimental import pallas as pl
from jax.experimental.pallas import tpu as pltpu

C_IN = 192
C_OUT = 192
K = 3
STRIDE = 2
BN_EPS = 1e-3


# ---------------------------------------------------------------------------
# Fused Pallas kernel: conv(3x3,s2) + folded BN + ReLU  ||  maxpool(3x3,s2)
# ---------------------------------------------------------------------------
def mixed5a_fused_kernel(taps_ref, w_ref, bias_ref, out_ref):
    # taps_ref: (9, TM, Cin)        window taps, shared by both branches
    # w_ref   : (9, Cin, Cout)      conv weights with BN scale folded in
    # bias_ref: (1, Cout)  f32      folded BN bias
    # out_ref : (TM, Cout + Cin) f32  -- conv in [:, :Cout], pool in [:, Cout:]
    tap = taps_ref[0]
    acc = jnp.dot(tap, w_ref[0], preferred_element_type=jnp.float32)
    pmax = tap.astype(jnp.float32)
    for t in range(1, K * K):                     # static unroll: 9 taps
        tap = taps_ref[t]
        acc += jnp.dot(tap, w_ref[t], preferred_element_type=jnp.float32)
        pmax = jnp.maximum(pmax, tap.astype(jnp.float32))
    conv = jnp.maximum(acc + bias_ref[...], 0.0)  # folded BN bias + ReLU
    # Single lane-dense (TM, 384) store instead of two masked 192-wide writes.
    out_ref[...] = jnp.concatenate([conv, pmax], axis=-1)


# ---------------------------------------------------------------------------
# Wrapper
# ---------------------------------------------------------------------------
def _round_up(a, b):
    return (a + b - 1) // b * b


def mixed_5a(x_nchw, conv_w, bn_gamma, bn_beta, bn_mean, bn_var,
             *, compute_dtype=jnp.float32, tm_max=512):
    """x_nchw: (N, 192, H, W). conv_w: (192, 192, 3, 3) PyTorch OIHW. -> NCHW."""
    n, c, h, w = x_nchw.shape
    assert c == C_IN
    ho = (h - K) // STRIDE + 1
    wo = (w - K) // STRIDE + 1
    m = n * ho * wo

    x_nhwc = jnp.transpose(x_nchw, (0, 2, 3, 1))

    # Single shared tap stack (9, M, Cin) consumed by BOTH branches.
    # TODO(synk): avoid materializing the tap stack in HBM entirely
    # (stride-2 space-to-depth + direct tap DMA) for bandwidth-starved chips.
    taps = []
    for di in range(K):
        for dj in range(K):
            taps.append(x_nhwc[:, di:di + STRIDE * ho:STRIDE,
                               dj:dj + STRIDE * wo:STRIDE, :])
    tap_stack = jnp.stack(taps, axis=0).reshape(K * K, m, C_IN)
    tap_stack = tap_stack.astype(compute_dtype)

    # Tile M (pad to a multiple of the tile) so the pipeline double-buffers
    # and VMEM stays bounded at real Mixed_5a shapes.
    tm = min(tm_max, _round_up(m, 8))
    m_pad = _round_up(m, tm)
    if m_pad != m:
        tap_stack = jnp.pad(tap_stack, ((0, 0), (0, m_pad - m), (0, 0)))

    # Fold inference BatchNorm into the conv weights + a bias vector.
    scale = (bn_gamma / jnp.sqrt(bn_var + BN_EPS)).astype(jnp.float32)
    bias = (bn_beta.astype(jnp.float32) - bn_mean.astype(jnp.float32) * scale)
    bias2d = bias.reshape(1, C_OUT)
    # OIHW -> (kh, kw, cin, cout) -> (9, cin, cout); tap index t = kh*3 + kw.
    w3d = jnp.transpose(conv_w, (2, 3, 1, 0)).reshape(K * K, C_IN, C_OUT)
    w3d = (w3d * scale[None, None, :]).astype(compute_dtype)

    fused = pl.pallas_call(
        mixed5a_fused_kernel,
        out_shape=jax.ShapeDtypeStruct((m_pad, C_OUT + C_IN), jnp.float32),
        grid_spec=pltpu.PrefetchScalarGridSpec(
            num_scalar_prefetch=0,
            grid=(m_pad // tm,),
            in_specs=[
                pl.BlockSpec((K * K, tm, C_IN), lambda i: (0, i, 0)),
                pl.BlockSpec((K * K, C_IN, C_OUT), lambda i: (0, 0, 0)),
                pl.BlockSpec((1, C_OUT), lambda i: (0, 0)),
            ],
            out_specs=pl.BlockSpec((tm, C_OUT + C_IN), lambda i: (i, 0)),
        ),
        compiler_params=pltpu.CompilerParams(
            dimension_semantics=("parallel",)),
    )(tap_stack, w3d, bias2d)

    # Drop pad rows; one reshape + one transpose back to NCHW (no concat pass).
    out_nhwc = fused[:m].reshape(n, ho, wo, C_OUT + C_IN)
    return jnp.transpose(out_nhwc, (0, 3, 1, 2))


# ---------------------------------------------------------------------------
# Pure-JAX reference for correctness check
# ---------------------------------------------------------------------------
def mixed_5a_ref(x_nchw, conv_w, bn_gamma, bn_beta, bn_mean, bn_var):
    x_nhwc = jnp.transpose(x_nchw, (0, 2, 3, 1))
    w_hwio = jnp.transpose(conv_w, (2, 3, 1, 0))
    y = lax.conv_general_dilated(
        x_nhwc, w_hwio, (STRIDE, STRIDE), "VALID",
        dimension_numbers=("NHWC", "HWIO", "NHWC"))
    scale = bn_gamma / jnp.sqrt(bn_var + BN_EPS)
    bias = bn_beta - bn_mean * scale
    y = jnp.maximum(y * scale + bias, 0.0)
    p = lax.reduce_window(x_nhwc, -jnp.inf, lax.max,
                          (1, K, K, 1), (1, STRIDE, STRIDE, 1), "VALID")
    out = jnp.concatenate([y, p], axis=-1)
    return jnp.transpose(out, (0, 3, 1, 2))


if __name__ == "__main__":
    key = jax.random.PRNGKey(0)
    k_x, k_w, k_g, k_b, k_m, k_v = jax.random.split(key, 6)

    # Small spatial size; channels fixed at 192 by the module definition.
    N, H, W = 2, 9, 9
    x = jax.random.normal(k_x, (N, C_IN, H, W), dtype=jnp.float32)

    conv_w = 0.05 * jax.random.normal(k_w, (C_OUT, C_IN, K, K), dtype=jnp.float32)
    bn_gamma = 1.0 + 0.1 * jax.random.normal(k_g, (C_OUT,), dtype=jnp.float32)
    bn_beta = 0.1 * jax.random.normal(k_b, (C_OUT,), dtype=jnp.float32)
    bn_mean = 0.1 * jax.random.normal(k_m, (C_OUT,), dtype=jnp.float32)
    bn_var = jnp.abs(jax.random.normal(k_v, (C_OUT,), dtype=jnp.float32)) + 0.5

    ref = jax.block_until_ready(
        mixed_5a_ref(x, conv_w, bn_gamma, bn_beta, bn_mean, bn_var))

    ho = (H - K) // STRIDE + 1
    wo = (W - K) // STRIDE + 1

    # f32 path: exact-tolerance validation.
    out = jax.block_until_ready(
        mixed_5a(x, conv_w, bn_gamma, bn_beta, bn_mean, bn_var))
    assert out.shape == (N, 2 * C_OUT, ho, wo)
    assert jnp.allclose(out, ref, rtol=1e-4, atol=1e-4), "f32 mismatch vs reference"

    # bf16 compute path (halved tap DMA + bf16 MXU on v6e/v7x): loose tolerance.
    out_bf16 = jax.block_until_ready(
        mixed_5a(x, conv_w, bn_gamma, bn_beta, bn_mean, bn_var,
                 compute_dtype=jnp.bfloat16))
    assert out_bf16.shape == (N, 2 * C_OUT, ho, wo)
    assert jnp.allclose(out_bf16, ref, rtol=5e-2, atol=5e-2), "bf16 mismatch vs reference"

    print("KERNEL_OK")
</pallas_src>

<mosaic_0001>
module attributes {stable_mosaic.version = 11 : i64} {
  func.func @mixed5a_fused_kernel(%arg0: i32, %arg1: memref<9x32x192xf32, #tpu.memory_space<vmem>>, %arg2: memref<9x192x192xf32, #tpu.memory_space<vmem>>, %arg3: memref<1x192xf32, #tpu.memory_space<vmem>>, %arg4: memref<32x384xf32, #tpu.memory_space<vmem>>) attributes {dimension_semantics = [#tpu.dimension_semantics<parallel>], iteration_bounds = array<i64: 1>, scalar_prefetch = 0 : i64, scratch_operands = 0 : i64, tpu.core_type = #tpu.core_type<tc>, window_params = [{transform_indices = @transform_0, window_bounds = array<i64: 9, 32, 192>}, {pipeline_mode = #tpu.pipeline_mode<synchronous>, transform_indices = @transform_1, window_bounds = array<i64: 9, 192, 192>}, {pipeline_mode = #tpu.pipeline_mode<synchronous>, transform_indices = @transform_2, window_bounds = array<i64: 1, 192>}, {transform_indices = @transform_3, window_bounds = array<i64: 32, 384>}]} {
    %c0 = arith.constant 0 : index
    %c0_0 = arith.constant 0 : index
    %c0_1 = arith.constant 0 : index
    %0 = vector.load %arg1[%c0, %c0_0, %c0_1] : memref<9x32x192xf32, #tpu.memory_space<vmem>>, vector<1x32x192xf32>
    %1 = vector.shape_cast %0 : vector<1x32x192xf32> to vector<32x192xf32>
    %c0_2 = arith.constant 0 : index
    %c0_3 = arith.constant 0 : index
    %c0_4 = arith.constant 0 : index
    %2 = vector.load %arg2[%c0_2, %c0_3, %c0_4] : memref<9x192x192xf32, #tpu.memory_space<vmem>>, vector<1x192x192xf32>
    %3 = vector.shape_cast %2 : vector<1x192x192xf32> to vector<192x192xf32>
    %cst = arith.constant dense<0.000000e+00> : vector<32x192xf32>
    %4 = tpu.matmul %1, %3, %cst {dimension_numbers = #tpu.dot_dimension_numbers<[1], [0], [0], [1], [0, 0, 1, 1], [], []>} : vector<32x192xf32>, vector<192x192xf32>, vector<32x192xf32> -> vector<32x192xf32>
    %c1 = arith.constant 1 : index
    %c0_5 = arith.constant 0 : index
    %c0_6 = arith.constant 0 : index
    %5 = vector.load %arg1[%c1, %c0_5, %c0_6] : memref<9x32x192xf32, #tpu.memory_space<vmem>>, vector<1x32x192xf32>
    %6 = vector.shape_cast %5 : vector<1x32x192xf32> to vector<32x192xf32>
    %c1_7 = arith.constant 1 : index
    %c0_8 = arith.constant 0 : index
    %c0_9 = arith.constant 0 : index
    %7 = vector.load %arg2[%c1_7, %c0_8, %c0_9] : memref<9x192x192xf32, #tpu.memory_space<vmem>>, vector<1x192x192xf32>
    %8 = vector.shape_cast %7 : vector<1x192x192xf32> to vector<192x192xf32>
    %cst_10 = arith.constant dense<0.000000e+00> : vector<32x192xf32>
    %9 = tpu.matmul %6, %8, %cst_10 {dimension_numbers = #tpu.dot_dimension_numbers<[1], [0], [0], [1], [0, 0, 1, 1], [], []>} : vector<32x192xf32>, vector<192x192xf32>, vector<32x192xf32> -> vector<32x192xf32>
    %10 = arith.addf %4, %9 : vector<32x192xf32>
    %11 = arith.maximumf %1, %6 : vector<32x192xf32>
    %c2 = arith.constant 2 : index
    %c0_11 = arith.constant 0 : index
    %c0_12 = arith.constant 0 : index
    %12 = vector.load %arg1[%c2, %c0_11, %c0_12] : memref<9x32x192xf32, #tpu.memory_space<vmem>>, vector<1x32x192xf32>
    %13 = vector.shape_cast %12 : vector<1x32x192xf32> to vector<32x192xf32>
    %c2_13 = arith.constant 2 : index
    %c0_14 = arith.constant 0 : index
    %c0_15 = arith.constant 0 : index
    %14 = vector.load %arg2[%c2_13, %c0_14, %c0_15] : memref<9x192x192xf32, #tpu.memory_space<vmem>>, vector<1x192x192xf32>
    %15 = vector.shape_cast %14 : vector<1x192x192xf32> to vector<192x192xf32>
    %cst_16 = arith.constant dense<0.000000e+00> : vector<32x192xf32>
    %16 = tpu.matmul %13, %15, %cst_16 {dimension_numbers = #tpu.dot_dimension_numbers<[1], [0], [0], [1], [0, 0, 1, 1], [], []>} : vector<32x192xf32>, vector<192x192xf32>, vector<32x192xf32> -> vector<32x192xf32>
    %17 = arith.addf %10, %16 : vector<32x192xf32>
    %18 = arith.maximumf %11, %13 : vector<32x192xf32>
    %c3 = arith.constant 3 : index
    %c0_17 = arith.constant 0 : index
    %c0_18 = arith.constant 0 : index
    %19 = vector.load %arg1[%c3, %c0_17, %c0_18] : memref<9x32x192xf32, #tpu.memory_space<vmem>>, vector<1x32x192xf32>
    %20 = vector.shape_cast %19 : vector<1x32x192xf32> to vector<32x192xf32>
    %c3_19 = arith.constant 3 : index
    %c0_20 = arith.constant 0 : index
    %c0_21 = arith.constant 0 : index
    %21 = vector.load %arg2[%c3_19, %c0_20, %c0_21] : memref<9x192x192xf32, #tpu.memory_space<vmem>>, vector<1x192x192xf32>
    %22 = vector.shape_cast %21 : vector<1x192x192xf32> to vector<192x192xf32>
    %cst_22 = arith.constant dense<0.000000e+00> : vector<32x192xf32>
    %23 = tpu.matmul %20, %22, %cst_22 {dimension_numbers = #tpu.dot_dimension_numbers<[1], [0], [0], [1], [0, 0, 1, 1], [], []>} : vector<32x192xf32>, vector<192x192xf32>, vector<32x192xf32> -> vector<32x192xf32>
    %24 = arith.addf %17, %23 : vector<32x192xf32>
    %25 = arith.maximumf %18, %20 : vector<32x192xf32>
    %c4 = arith.constant 4 : index
    %c0_23 = arith.constant 0 : index
    %c0_24 = arith.constant 0 : index
    %26 = vector.load %arg1[%c4, %c0_23, %c0_24] : memref<9x32x192xf32, #tpu.memory_space<vmem>>, vector<1x32x192xf32>
    %27 = vector.shape_cast %26 : vector<1x32x192xf32> to vector<32x192xf32>
    %c4_25 = arith.constant 4 : index
    %c0_26 = arith.constant 0 : index
    %c0_27 = arith.constant 0 : index
    %28 = vector.load %arg2[%c4_25, %c0_26, %c0_27] : memref<9x192x192xf32, #tpu.memory_space<vmem>>, vector<1x192x192xf32>
    %29 = vector.shape_cast %28 : vector<1x192x192xf32> to vector<192x192xf32>
    %cst_28 = arith.constant dense<0.000000e+00> : vector<32x192xf32>
    %30 = tpu.matmul %27, %29, %cst_28 {dimension_numbers = #tpu.dot_dimension_numbers<[1], [0], [0], [1], [0, 0, 1, 1], [], []>} : vector<32x192xf32>, vector<192x192xf32>, vector<32x192xf32> -> vector<32x192xf32>
    %31 = arith.addf %24, %30 : vector<32x192xf32>
    %32 = arith.maximumf %25, %27 : vector<32x192xf32>
    %c5 = arith.constant 5 : index
    %c0_29 = arith.constant 0 : index
    %c0_30 = arith.constant 0 : index
    %33 = vector.load %arg1[%c5, %c0_29, %c0_30] : memref<9x32x192xf32, #tpu.memory_space<vmem>>, vector<1x32x192xf32>
    %34 = vector.shape_cast %33 : vector<1x32x192xf32> to vector<32x192xf32>
    %c5_31 = arith.constant 5 : index
    %c0_32 = arith.constant 0 : index
    %c0_33 = arith.constant 0 : index
    %35 = vector.load %arg2[%c5_31, %c0_32, %c0_33] : memref<9x192x192xf32, #tpu.memory_space<vmem>>, vector<1x192x192xf32>
    %36 = vector.shape_cast %35 : vector<1x192x192xf32> to vector<192x192xf32>
    %cst_34 = arith.constant dense<0.000000e+00> : vector<32x192xf32>
    %37 = tpu.matmul %34, %36, %cst_34 {dimension_numbers = #tpu.dot_dimension_numbers<[1], [0], [0], [1], [0, 0, 1, 1], [], []>} : vector<32x192xf32>, vector<192x192xf32>, vector<32x192xf32> -> vector<32x192xf32>
    %38 = arith.addf %31, %37 : vector<32x192xf32>
    %39 = arith.maximumf %32, %34 : vector<32x192xf32>
    %c6 = arith.constant 6 : index
    %c0_35 = arith.constant 0 : index
    %c0_36 = arith.constant 0 : index
    %40 = vector.load %arg1[%c6, %c0_35, %c0_36] : memref<9x32x192xf32, #tpu.memory_space<vmem>>, vector<1x32x192xf32>
    %41 = vector.shape_cast %40 : vector<1x32x192xf32> to vector<32x192xf32>
    %c6_37 = arith.constant 6 : index
    %c0_38 = arith.constant 0 : index
    %c0_39 = arith.constant 0 : index
    %42 = vector.load %arg2[%c6_37, %c0_38, %c0_39] : memref<9x192x192xf32, #tpu.memory_space<vmem>>, vector<1x192x192xf32>
    %43 = vector.shape_cast %42 : vector<1x192x192xf32> to vector<192x192xf32>
    %cst_40 = arith.constant dense<0.000000e+00> : vector<32x192xf32>
    %44 = tpu.matmul %41, %43, %cst_40 {dimension_numbers = #tpu.dot_dimension_numbers<[1], [0], [0], [1], [0, 0, 1, 1], [], []>} : vector<32x192xf32>, vector<192x192xf32>, vector<32x192xf32> -> vector<32x192xf32>
    %45 = arith.addf %38, %44 : vector<32x192xf32>
    %46 = arith.maximumf %39, %41 : vector<32x192xf32>
    %c7 = arith.constant 7 : index
    %c0_41 = arith.constant 0 : index
    %c0_42 = arith.constant 0 : index
    %47 = vector.load %arg1[%c7, %c0_41, %c0_42] : memref<9x32x192xf32, #tpu.memory_space<vmem>>, vector<1x32x192xf32>
    %48 = vector.shape_cast %47 : vector<1x32x192xf32> to vector<32x192xf32>
    %c7_43 = arith.constant 7 : index
    %c0_44 = arith.constant 0 : index
    %c0_45 = arith.constant 0 : index
    %49 = vector.load %arg2[%c7_43, %c0_44, %c0_45] : memref<9x192x192xf32, #tpu.memory_space<vmem>>, vector<1x192x192xf32>
    %50 = vector.shape_cast %49 : vector<1x192x192xf32> to vector<192x192xf32>
    %cst_46 = arith.constant dense<0.000000e+00> : vector<32x192xf32>
    %51 = tpu.matmul %48, %50, %cst_46 {dimension_numbers = #tpu.dot_dimension_numbers<[1], [0], [0], [1], [0, 0, 1, 1], [], []>} : vector<32x192xf32>, vector<192x192xf32>, vector<32x192xf32> -> vector<32x192xf32>
    %52 = arith.addf %45, %51 : vector<32x192xf32>
    %53 = arith.maximumf %46, %48 : vector<32x192xf32>
    %c8 = arith.constant 8 : index
    %c0_47 = arith.constant 0 : index
    %c0_48 = arith.constant 0 : index
    %54 = vector.load %arg1[%c8, %c0_47, %c0_48] : memref<9x32x192xf32, #tpu.memory_space<vmem>>, vector<1x32x192xf32>
    %55 = vector.shape_cast %54 : vector<1x32x192xf32> to vector<32x192xf32>
    %c8_49 = arith.constant 8 : index
    %c0_50 = arith.constant 0 : index
    %c0_51 = arith.constant 0 : index
    %56 = vector.load %arg2[%c8_49, %c0_50, %c0_51] : memref<9x192x192xf32, #tpu.memory_space<vmem>>, vector<1x192x192xf32>
    %57 = vector.shape_cast %56 : vector<1x192x192xf32> to vector<192x192xf32>
    %cst_52 = arith.constant dense<0.000000e+00> : vector<32x192xf32>
    %58 = tpu.matmul %55, %57, %cst_52 {dimension_numbers = #tpu.dot_dimension_numbers<[1], [0], [0], [1], [0, 0, 1, 1], [], []>} : vector<32x192xf32>, vector<192x192xf32>, vector<32x192xf32> -> vector<32x192xf32>
    %59 = arith.addf %52, %58 : vector<32x192xf32>
    %60 = arith.maximumf %53, %55 : vector<32x192xf32>
    %c0_53 = arith.constant 0 : index
    %c0_54 = arith.constant 0 : index
    %61 = vector.load %arg3[%c0_53, %c0_54] : memref<1x192xf32, #tpu.memory_space<vmem>>, vector<1x192xf32>
    %62 = vector.broadcast %61 : vector<1x192xf32> to vector<32x192xf32>
    %63 = arith.addf %59, %62 : vector<32x192xf32>
    %cst_55 = arith.constant 0.000000e+00 : f32
    %64 = vector.broadcast %cst_55 : f32 to vector<32x192xf32>
    %65 = arith.maximumf %63, %64 : vector<32x192xf32>
    %66 = tpu.concatenate %65, %60 in 1 : vector<32x192xf32>, vector<32x192xf32> -> vector<32x384xf32>
    %c0_56 = arith.constant 0 : index
    %c0_57 = arith.constant 0 : index
    %67 = vector.load %arg4[%c0_56, %c0_57] : memref<32x384xf32, #tpu.memory_space<vmem>>, vector<32x384xf32>
    tpu.vector_store %arg4[%c0_56, %c0_57], %66 {strides = array<i32>} : memref<32x384xf32, #tpu.memory_space<vmem>>, vector<32x384xf32>,
    return
  }
  func.func @transform_0(%arg0: i32) -> (i32, i32, i32) {
    %c0_i32 = arith.constant 0 : i32
    %c0_i32_0 = arith.constant 0 : i32
    %c0_i32_1 = arith.constant 0 : i32
    return %c0_i32, %arg0, %c0_i32_0 : i32, i32, i32
  }
  func.func @transform_1(%arg0: i32) -> (i32, i32, i32) {
    %c0_i32 = arith.constant 0 : i32
    %c0_i32_0 = arith.constant 0 : i32
    %c0_i32_1 = arith.constant 0 : i32
    %c0_i32_2 = arith.constant 0 : i32
    return %c0_i32, %c0_i32_0, %c0_i32_1 : i32, i32, i32
  }
  func.func @transform_2(%arg0: i32) -> (i32, i32) {
    %c0_i32 = arith.constant 0 : i32
    %c0_i32_0 = arith.constant 0 : i32
    %c0_i32_1 = arith.constant 0 : i32
    return %c0_i32, %c0_i32_0 : i32, i32
  }
  func.func @transform_3(%arg0: i32) -> (i32, i32) {
    %c0_i32 = arith.constant 0 : i32
    %c0_i32_0 = arith.constant 0 : i32
    return %arg0, %c0_i32 : i32, i32
  }
}

</mosaic_0001>

<llo_original>
// kernel: tpu_custom_call.1
$region0: #{tpu_custom_call.1}
  #allocation0 [shape = 'u32[]', space=smem, size = 0x4, offset = 0x4, fixed_abs, tag = 'smem constant byte address 0x4 - core index']
  #allocation1 [shape = 'u32[72,128]{1,0:T(1,128)}', space=vmem, size = 0x9000, scoped, tag = 'internal scratch']
  %s0 = inlined_call_operand.hbm [shape: f32[9,32,192], index: 0, kind: input, shape index: {}]
  %s1 = inlined_call_operand.hbm [shape: f32[9,192,192], index: 1, kind: input, shape index: {}]
  %s2 = inlined_call_operand.hbm [shape: f32[1,192], index: 2, kind: input, shape index: {}]
  %s3 = inlined_call_operand.hbm [shape: f32[32,384], index: 3, kind: output, shape index: {}]
  %s4 = sld [smem:[#allocation0]]
  $region34: #{tpu_custom_call.1} parent=0
    _
  %s6 = ssub.s32 1, %s4
  %s7 = scalar_select 0, %s6, %s4
  $region1: #{tpu_custom_call.1} parent=0
    #allocation2 [shape = 'u8[294912]{0}', space=vmem, size = 0x48000, scoped, tag = 'input window, operand 0, single buffered']
    #allocation3 [shape = 's32[1]{0}', space=sflag, size = 0x4, scoped, tag = 'scoped memory for tpu_custom_call.1']
    #allocation4 [shape = 's32[1]{0}', space=sflag, size = 0x4, scoped, tag = 'scoped memory for tpu_custom_call.1']
    #allocation5 [shape = 'u8[1769472]{0}', space=vmem, size = 0x1b0000, scoped, tag = 'input window, operand 1, single buffered']
    #allocation6 [shape = 's32[1]{0}', space=sflag, size = 0x4, scoped, tag = 'scoped memory for tpu_custom_call.1']
    #allocation7 [shape = 'u8[1024]{0}', space=vmem, size = 0x400, scoped, tag = 'input window, operand 2, single buffered']
    #allocation8 [shape = 'u8[49152]{0}', space=vmem, size = 0xc000, scoped, tag = 'output window, operand 0, single buffered']
    %8 = vsyncpa [#allocation3], 0
    %9 = vsyncpa [#allocation6], 0
    %10 = vsyncpa [#allocation4], 0
    // Predicated region
    $region2: #{tpu_custom_call.1} parent=1 // pred_check
      _
    $region3: #{tpu_custom_call.1} parent=1 // pred_check_branch
      %12 = sbr.rel (0) target = $region5
    $region4: #{tpu_custom_call.1} parent=1 // pred_region
      %14 = vsyncadd [#allocation3], 0
      %s15 = sshll.u32 %s0, 4
      %s16 = int_to_ptr.hbm [resolvable:$true] %s15
      %s17 = sshll.u32 [#allocation2], 4
      %s18 = int_to_ptr.vmem [resolvable:$true] %s17
      %23 = dma.hbm_to_vmem [thread:$0]  %s16, 9216, %s18, [#allocation3], 256, 256, 16
    $region5: #{tpu_custom_call.1} parent=1 // pred_fallthru
      _
    // Predicated region
    $region6: #{tpu_custom_call.1} parent=1 // pred_check
      _
    $region7: #{tpu_custom_call.1} parent=1 // pred_check_branch
      %25 = sbr.rel (0) target = $region9
    $region8: #{tpu_custom_call.1} parent=1 // pred_region
      %27 = vsyncadd [#allocation6], 0
      %s28 = sshll.u32 %s1, 4
      %s29 = int_to_ptr.hbm [resolvable:$true] %s28
      %s30 = sshll.u32 [#allocation5], 4
      %s31 = int_to_ptr.vmem [resolvable:$true] %s30
      %36 = dma.hbm_to_vmem [thread:$0]  %s29, 55296, %s31, [#allocation6], 256, 256, 16
    $region9: #{tpu_custom_call.1} parent=1 // pred_fallthru
      _
    // Predicated region
    $region10: #{tpu_custom_call.1} parent=1 // pred_check
      _
    $region11: #{tpu_custom_call.1} parent=1 // pred_check_branch
      %38 = sbr.rel (0) target = $region13
    $region12: #{tpu_custom_call.1} parent=1 // pred_region
      %40 = vsyncadd [#allocation6], 0
      %s42 = sshll.u32 %s2, 4
      %s43 = int_to_ptr.hbm [resolvable:$true] %s42
      %s44 = sshll.u32 [#allocation7], 4
      %s45 = int_to_ptr.vmem [resolvable:$true] %s44
      %47 = dma.hbm_to_vmem [thread:$0]  %s43, 32, %s45, [#allocation6]
    $region13: #{tpu_custom_call.1} parent=1 // pred_fallthru
      _
    // Predicated region
    $region14: #{tpu_custom_call.1} parent=1 // pred_check
      _
    $region15: #{tpu_custom_call.1} parent=1 // pred_check_branch
      %49 = sbr.rel (0) target = $region17
    $region16: #{tpu_custom_call.1} parent=1 // pred_region
      %51 = dma.done [#allocation3], 9216
    $region17: #{tpu_custom_call.1} parent=1 // pred_fallthru
      _
    // Predicated region
    $region18: #{tpu_custom_call.1} parent=1 // pred_check
      _
    $region19: #{tpu_custom_call.1} parent=1 // pred_check_branch
      %53 = sbr.rel (0) target = $region21
    $region20: #{tpu_custom_call.1} parent=1 // pred_region
      %55 = dma.done [#allocation6], 55296
    $region21: #{tpu_custom_call.1} parent=1 // pred_fallthru
      _
    // Predicated region
    $region22: #{tpu_custom_call.1} parent=1 // pred_check
      _
    $region23: #{tpu_custom_call.1} parent=1 // pred_check_branch
      %57 = sbr.rel (0) target = $region25
    $region24: #{tpu_custom_call.1} parent=1 // pred_region
      %59 = dma.done [#allocation6], 32
    $region25: #{tpu_custom_call.1} parent=1 // pred_fallthru
      _
    %v60 = vld [vmem:[#allocation2] sm:$0xff]
    %v61 = vld [vmem:[#allocation2 + $0x8] sm:$0xff]
    %v62 = vld [vmem:[#allocation2 + $0x10] sm:$0xff]
    %v63 = vld [vmem:[#allocation2 + $0x18] sm:$0xff]
    %v64 = vld [vmem:[#allocation2 + $0x20] sm:$0xff]
    %v65 = vld [vmem:[#allocation2 + $0x28] sm:$0xff]
    %v66 = vld [vmem:[#allocation2 + $0x30] sm:$0xff]
    %v67 = vld [vmem:[#allocation2 + $0x38] sm:$0xff]
    %v68 = vld [vmem:[#allocation5] sm:$0xff]
    %v69 = vld [vmem:[#allocation5 + $0x8] sm:$0xff]
    %v70 = vld [vmem:[#allocation5 + $0x10] sm:$0xff]
    %v71 = vld [vmem:[#allocation5 + $0x18] sm:$0xff]
    %v72 = vld [vmem:[#allocation5 + $0x20] sm:$0xff]
    %v73 = vld [vmem:[#allocation5 + $0x28] sm:$0xff]
    %v74 = vld [vmem:[#allocation5 + $0x30] sm:$0xff]
    %v75 = vld [vmem:[#allocation5 + $0x38] sm:$0xff]
    %v76 = vld [vmem:[#allocation5 + $0x40] sm:$0xff]
    %v77 = vld [vmem:[#allocation5 + $0x48] sm:$0xff]
    %v78 = vld [vmem:[#allocation5 + $0x50] sm:$0xff]
    %v79 = vld [vmem:[#allocation5 + $0x58] sm:$0xff]
    %v80 = vld [vmem:[#allocation5 + $0x60] sm:$0xff]
    %v81 = vld [vmem:[#allocation5 + $0x68] sm:$0xff]
    %v82 = vld [vmem:[#allocation5 + $0x70] sm:$0xff]
    %v83 = vld [vmem:[#allocation5 + $0x78] sm:$0xff]
    %v84 = vld [vmem:[#allocation5 + $0x80] sm:$0xff]
    %v85 = vld [vmem:[#allocation5 + $0x88] sm:$0xff]
    %v86 = vld [vmem:[#allocation5 + $0x90] sm:$0xff]
    %v87 = vld [vmem:[#allocation5 + $0x98] sm:$0xff]
    %v88 = vld [vmem:[#allocation5 + $0xa0] sm:$0xff]
    %v89 = vld [vmem:[#allocation5 + $0xa8] sm:$0xff]
    %v90 = vld [vmem:[#allocation5 + $0xb0] sm:$0xff]
    %v91 = vld [vmem:[#allocation5 + $0xb8] sm:$0xff]
    %v92 = vld [vmem:[#allocation5 + $0xc0] sm:$0xff]
    %v93 = vld [vmem:[#allocation5 + $0xc8] sm:$0xff]
    %v94 = vld [vmem:[#allocation5 + $0xd0] sm:$0xff]
    %v95 = vld [vmem:[#allocation5 + $0xd8] sm:$0xff]
    %v96 = vld [vmem:[#allocation5 + $0xe0] sm:$0xff]
    %v97 = vld [vmem:[#allocation5 + $0xe8] sm:$0xff]
    %v98 = vld [vmem:[#allocation5 + $0xf0] sm:$0xff]
    %v99 = vld [vmem:[#allocation5 + $0xf8] sm:$0xff]
    %v100 = vld [vmem:[#allocation5 + $0x100] sm:$0xff]
    %v101 = vld [vmem:[#allocation5 + $0x108] sm:$0xff]
    %v102 = vld [vmem:[#allocation5 + $0x110] sm:$0xff]
    %v103 = vld [vmem:[#allocation5 + $0x118] sm:$0xff]
    %v104 = vld [vmem:[#allocation5 + $0x120] sm:$0xff]
    %v105 = vld [vmem:[#allocation5 + $0x128] sm:$0xff]
    %v106 = vld [vmem:[#allocation5 + $0x130] sm:$0xff]
    %v107 = vld [vmem:[#allocation5 + $0x138] sm:$0xff]
    %v108 = vld [vmem:[#allocation5 + $0x140] sm:$0xff]
    %v109 = vld [vmem:[#allocation5 + $0x148] sm:$0xff]
    %v110 = vld [vmem:[#allocation5 + $0x150] sm:$0xff]
    %v111 = vld [vmem:[#allocation5 + $0x158] sm:$0xff]
    %v112 = vld [vmem:[#allocation5 + $0x160] sm:$0xff]
    %v113 = vld [vmem:[#allocation5 + $0x168] sm:$0xff]
    %v114 = vld [vmem:[#allocation5 + $0x170] sm:$0xff]
    %v115 = vld [vmem:[#allocation5 + $0x178] sm:$0xff]
    %s116 = scalar_lea.vmem [#allocation2], 64
    %v117 = vld [vmem:[%s116] sm:$0xff]
    %v118 = vld [vmem:[%s116 + $0x8] sm:$0xff]
    %v119 = vld [vmem:[%s116 + $0x10] sm:$0xff]
    %v120 = vld [vmem:[%s116 + $0x18] sm:$0xff]
    %v121 = vld [vmem:[%s116 + $0x20] sm:$0xff]
    %v122 = vld [vmem:[%s116 + $0x28] sm:$0xff]
    %v123 = vld [vmem:[%s116 + $0x30] sm:$0xff]
    %v124 = vld [vmem:[%s116 + $0x38] sm:$0xff]
    %s125 = scalar_lea.vmem [#allocation5], 384
    %v126 = vld [vmem:[%s125] sm:$0xff]
    %v127 = vld [vmem:[%s125 + $0x8] sm:$0xff]
    %v128 = vld [vmem:[%s125 + $0x10] sm:$0xff]
    %v129 = vld [vmem:[%s125 + $0x18] sm:$0xff]
    %v130 = vld [vmem:[%s125 + $0x20] sm:$0xff]
    %v131 = vld [vmem:[%s125 + $0x28] sm:$0xff]
    %v132 = vld [vmem:[%s125 + $0x30] sm:$0xff]
    %v133 = vld [vmem:[%s125 + $0x38] sm:$0xff]
    %v134 = vld [vmem:[%s125 + $0x40] sm:$0xff]
    %v135 = vld [vmem:[%s125 + $0x48] sm:$0xff]
    %v136 = vld [vmem:[%s125 + $0x50] sm:$0xff]
    %v137 = vld [vmem:[%s125 + $0x58] sm:$0xff]
    %v138 = vld [vmem:[%s125 + $0x60] sm:$0xff]
    %v139 = vld [vmem:[%s125 + $0x68] sm:$0xff]
    %v140 = vld [vmem:[%s125 + $0x70] sm:$0xff]
    %v141 = vld [vmem:[%s125 + $0x78] sm:$0xff]
    %v142 = vld [vmem:[%s125 + $0x80] sm:$0xff]
    %v143 = vld [vmem:[%s125 + $0x88] sm:$0xff]
    %v144 = vld [vmem:[%s125 + $0x90] sm:$0xff]
    %v145 = vld [vmem:[%s125 + $0x98] sm:$0xff]
    %v146 = vld [vmem:[%s125 + $0xa0] sm:$0xff]
    %v147 = vld [vmem:[%s125 + $0xa8] sm:$0xff]
    %v148 = vld [vmem:[%s125 + $0xb0] sm:$0xff]
    %v149 = vld [vmem:[%s125 + $0xb8] sm:$0xff]
    %v150 = vld [vmem:[%s125 + $0xc0] sm:$0xff]
    %v151 = vld [vmem:[%s125 + $0xc8] sm:$0xff]
    %v152 = vld [vmem:[%s125 + $0xd0] sm:$0xff]
    %v153 = vld [vmem:[%s125 + $0xd8] sm:$0xff]
    %v154 = vld [vmem:[%s125 + $0xe0] sm:$0xff]
    %v155 = vld [vmem:[%s125 + $0xe8] sm:$0xff]
    %v156 = vld [vmem:[%s125 + $0xf0] sm:$0xff]
    %v157 = vld [vmem:[%s125 + $0xf8] sm:$0xff]
    %v158 = vld [vmem:[%s125 + $0x100] sm:$0xff]
    %v159 = vld [vmem:[%s125 + $0x108] sm:$0xff]
    %v160 = vld [vmem:[%s125 + $0x110] sm:$0xff]
    %v161 = vld [vmem:[%s125 + $0x118] sm:$0xff]
    %v162 = vld [vmem:[%s125 + $0x120] sm:$0xff]
    %v163 = vld [vmem:[%s125 + $0x128] sm:$0xff]
    %v164 = vld [vmem:[%s125 + $0x130] sm:$0xff]
    %v165 = vld [vmem:[%s125 + $0x138] sm:$0xff]
    %v166 = vld [vmem:[%s125 + $0x140] sm:$0xff]
    %v167 = vld [vmem:[%s125 + $0x148] sm:$0xff]
    %v168 = vld [vmem:[%s125 + $0x150] sm:$0xff]
    %v169 = vld [vmem:[%s125 + $0x158] sm:$0xff]
    %v170 = vld [vmem:[%s125 + $0x160] sm:$0xff]
    %v171 = vld [vmem:[%s125 + $0x168] sm:$0xff]
    %v172 = vld [vmem:[%s125 + $0x170] sm:$0xff]
    %v173 = vld [vmem:[%s125 + $0x178] sm:$0xff]
    %vm174 = vcmask 523264
    %v176 = vsel %vm174, %v118, 0
    %v179 = vsel %vm174, %v120, 0
    %v182 = vsel %vm174, %v122, 0
    %v185 = vsel %vm174, %v124, 0
    %187 = vmatpush.msra.mxu0 %v156
    %188 = vmatpush.msra.mxu0 %v154
    %189 = vmatpush.msra.mxu0 %v152
    %190 = vmatpush.msra.mxu0 %v150
    %191 = vmatpush.msra.mxu0 %v148
    %192 = vmatpush.msra.mxu0 %v146
    %193 = vmatpush.msra.mxu0 %v144
    %194 = vmatpush.msra.mxu0 %v142
    %195 = vmatpush.msra.mxu0 %v140
    %196 = vmatpush.msra.mxu0 %v138
    %197 = vmatpush.msra.mxu0 %v136
    %198 = vmatpush.msra.mxu0 %v134
    %199 = vmatpush.msra.mxu0 %v132
    %200 = vmatpush.msra.mxu0 %v130
    %201 = vmatpush.msra.mxu0 %v128
    %202 = vmatpush.msra.mxu0 %v126
    %203 = vmatmul.f32.gmra.mxu0 %v117
    %v204 = vpop.f32.mrf.mxu0
    %v205 = vadd.f32 0.0, %v204
    %206 = vmatmul.f32.gmra.mxu0 %v119
    %v207 = vpop.f32.mrf.mxu0
    %v208 = vadd.f32 0.0, %v207
    %209 = vmatmul.f32.gmra.mxu0 %v121
    %v210 = vpop.f32.mrf.mxu0
    %v211 = vadd.f32 0.0, %v210
    %212 = vmatmul.f32.gmra.mxu0 %v123
    %v213 = vpop.f32.mrf.mxu0
    %v214 = vadd.f32 0.0, %v213
    %215 = vdwg.mxu0
    %216 = vmatpush.msra.mxu0 0.0
    %217 = vmatpush.msra.mxu0 0.0
    %218 = vmatpush.msra.mxu0 0.0
    %219 = vmatpush.msra.mxu0 0.0
    %220 = vmatpush.msra.mxu0 0.0
    %221 = vmatpush.msra.mxu0 0.0
    %222 = vmatpush.msra.mxu0 0.0
    %223 = vmatpush.msra.mxu0 0.0
    %224 = vmatpush.msra.mxu0 %v172
    %225 = vmatpush.msra.mxu0 %v170
    %226 = vmatpush.msra.mxu0 %v168
    %227 = vmatpush.msra.mxu0 %v166
    %228 = vmatpush.msra.mxu0 %v164
    %229 = vmatpush.msra.mxu0 %v162
    %230 = vmatpush.msra.mxu0 %v160
    %231 = vmatpush.msra.mxu0 %v158
    %232 = vmatmul.f32.gmra.mxu0 %v176
    %v233 = vpop.f32.mrf.mxu0
    %v234 = vadd.f32 %v205, %v233
    %235 = vmatmul.f32.gmra.mxu0 %v179
    %v236 = vpop.f32.mrf.mxu0
    %v237 = vadd.f32 %v208, %v236
    %238 = vmatmul.f32.gmra.mxu0 %v182
    %v239 = vpop.f32.mrf.mxu0
    %v240 = vadd.f32 %v211, %v239
    %241 = vmatmul.f32.gmra.mxu0 %v185
    %v242 = vpop.f32.mrf.mxu0
    %v243 = vadd.f32 %v214, %v242
    %244 = vdwg.mxu0
    %245 = vmatpush.msra.mxu0 %v157
    %246 = vmatpush.msra.mxu0 %v155
    %247 = vmatpush.msra.mxu0 %v153
    %248 = vmatpush.msra.mxu0 %v151
    %249 = vmatpush.msra.mxu0 %v149
    %250 = vmatpush.msra.mxu0 %v147
    %251 = vmatpush.msra.mxu0 %v145
    %252 = vmatpush.msra.mxu0 %v143
    %253 = vmatpush.msra.mxu0 %v141
    %254 = vmatpush.msra.mxu0 %v139
    %255 = vmatpush.msra.mxu0 %v137
    %256 = vmatpush.msra.mxu0 %v135
    %257 = vmatpush.msra.mxu0 %v133
    %258 = vmatpush.msra.mxu0 %v131
    %259 = vmatpush.msra.mxu0 %v129
    %260 = vmatpush.msra.mxu0 %v127
    %261 = vmatmul.f32.gmra.mxu0 %v117
    %v262 = vpop.f32.mrf.mxu0
    %v263 = vadd.f32 0.0, %v262
    %264 = vmatmul.f32.gmra.mxu0 %v119
    %v265 = vpop.f32.mrf.mxu0
    %v266 = vadd.f32 0.0, %v265
    %267 = vmatmul.f32.gmra.mxu0 %v121
    %v268 = vpop.f32.mrf.mxu0
    %v269 = vadd.f32 0.0, %v268
    %270 = vmatmul.f32.gmra.mxu0 %v123
    %v271 = vpop.f32.mrf.mxu0
    %v272 = vadd.f32 0.0, %v271
    %273 = vdwg.mxu0
    %274 = vmatpush.msra.mxu0 0.0
    %275 = vmatpush.msra.mxu0 0.0
    %276 = vmatpush.msra.mxu0 0.0
    %277 = vmatpush.msra.mxu0 0.0
    %278 = vmatpush.msra.mxu0 0.0
    %279 = vmatpush.msra.mxu0 0.0
    %280 = vmatpush.msra.mxu0 0.0
    %281 = vmatpush.msra.mxu0 0.0
    %282 = vmatpush.msra.mxu0 %v173
    %283 = vmatpush.msra.mxu0 %v171
    %284 = vmatpush.msra.mxu0 %v169
    %285 = vmatpush.msra.mxu0 %v167
    %286 = vmatpush.msra.mxu0 %v165
    %287 = vmatpush.msra.mxu0 %v163
    %288 = vmatpush.msra.mxu0 %v161
    %289 = vmatpush.msra.mxu0 %v159
    %290 = vmatmul.f32.gmra.mxu0 %v176
    %v291 = vpop.f32.mrf.mxu0
    %v292 = vadd.f32 %v263, %v291
    %293 = vmatmul.f32.gmra.mxu0 %v179
    %v294 = vpop.f32.mrf.mxu0
    %v295 = vadd.f32 %v266, %v294
    %296 = vmatmul.f32.gmra.mxu0 %v182
    %v297 = vpop.f32.mrf.mxu0
    %v298 = vadd.f32 %v269, %v297
    %299 = vmatmul.f32.gmra.mxu0 %v185
    %v300 = vpop.f32.mrf.mxu0
    %v301 = vadd.f32 %v272, %v300
    %302 = vdwg.mxu0
    %v304 = vsel %vm174, %v61, 0
    %v307 = vsel %vm174, %v63, 0
    %v310 = vsel %vm174, %v65, 0
    %v313 = vsel %vm174, %v67, 0
    %315 = vmatpush.msra.mxu0 %v98
    %316 = vmatpush.msra.mxu0 %v96
    %317 = vmatpush.msra.mxu0 %v94
    %318 = vmatpush.msra.mxu0 %v92
    %319 = vmatpush.msra.mxu0 %v90
    %320 = vmatpush.msra.mxu0 %v88
    %321 = vmatpush.msra.mxu0 %v86
    %322 = vmatpush.msra.mxu0 %v84
    %323 = vmatpush.msra.mxu0 %v82
    %324 = vmatpush.msra.mxu0 %v80
    %325 = vmatpush.msra.mxu0 %v78
    %326 = vmatpush.msra.mxu0 %v76
    %327 = vmatpush.msra.mxu0 %v74
    %328 = vmatpush.msra.mxu0 %v72
    %329 = vmatpush.msra.mxu0 %v70
    %330 = vmatpush.msra.mxu0 %v68
    %331 = vmatmul.f32.gmra.mxu0 %v60
    %v332 = vpop.f32.mrf.mxu0
    %v333 = vadd.f32 %v234, %v332
    %334 = vmatmul.f32.gmra.mxu0 %v62
    %v335 = vpop.f32.mrf.mxu0
    %v336 = vadd.f32 %v237, %v335
    %337 = vmatmul.f32.gmra.mxu0 %v64
    %v338 = vpop.f32.mrf.mxu0
    %v339 = vadd.f32 %v240, %v338
    %340 = vmatmul.f32.gmra.mxu0 %v66
    %v341 = vpop.f32.mrf.mxu0
    %v342 = vadd.f32 %v243, %v341
    %343 = vdwg.mxu0
    %344 = vmatpush.msra.mxu0 0.0
    %345 = vmatpush.msra.mxu0 0.0
    %346 = vmatpush.msra.mxu0 0.0
    %347 = vmatpush.msra.mxu0 0.0
    %348 = vmatpush.msra.mxu0 0.0
    %349 = vmatpush.msra.mxu0 0.0
    %350 = vmatpush.msra.mxu0 0.0
    %351 = vmatpush.msra.mxu0 0.0
    %352 = vmatpush.msra.mxu0 %v114
    %353 = vmatpush.msra.mxu0 %v112
    %354 = vmatpush.msra.mxu0 %v110
    %355 = vmatpush.msra.mxu0 %v108
    %356 = vmatpush.msra.mxu0 %v106
    %357 = vmatpush.msra.mxu0 %v104
    %358 = vmatpush.msra.mxu0 %v102
    %359 = vmatpush.msra.mxu0 %v100
    %360 = vmatmul.f32.gmra.mxu0 %v304
    %v361 = vpop.f32.mrf.mxu0
    %v362 = vadd.f32 %v333, %v361
    %363 = vmatmul.f32.gmra.mxu0 %v307
    %v364 = vpop.f32.mrf.mxu0
    %v365 = vadd.f32 %v336, %v364
    %366 = vmatmul.f32.gmra.mxu0 %v310
    %v367 = vpop.f32.mrf.mxu0
    %v368 = vadd.f32 %v339, %v367
    %369 = vmatmul.f32.gmra.mxu0 %v313
    %v370 = vpop.f32.mrf.mxu0
    %v371 = vadd.f32 %v342, %v370
    %372 = vdwg.mxu0
    %373 = vmatpush.msra.mxu0 %v99
    %374 = vmatpush.msra.mxu0 %v97
    %375 = vmatpush.msra.mxu0 %v95
    %376 = vmatpush.msra.mxu0 %v93
    %377 = vmatpush.msra.mxu0 %v91
    %378 = vmatpush.msra.mxu0 %v89
    %379 = vmatpush.msra.mxu0 %v87
    %380 = vmatpush.msra.mxu0 %v85
    %381 = vmatpush.msra.mxu0 %v83
    %382 = vmatpush.msra.mxu0 %v81
    %383 = vmatpush.msra.mxu0 %v79
    %384 = vmatpush.msra.mxu0 %v77
    %385 = vmatpush.msra.mxu0 %v75
    %386 = vmatpush.msra.mxu0 %v73
    %387 = vmatpush.msra.mxu0 %v71
    %388 = vmatpush.msra.mxu0 %v69
    %389 = vmatmul.f32.gmra.mxu0 %v60
    %v390 = vpop.f32.mrf.mxu0
    %v391 = vadd.f32 %v292, %v390
    %392 = vmatmul.f32.gmra.mxu0 %v62
    %v393 = vpop.f32.mrf.mxu0
    %v394 = vadd.f32 %v295, %v393
    %395 = vmatmul.f32.gmra.mxu0 %v64
    %v396 = vpop.f32.mrf.mxu0
    %v397 = vadd.f32 %v298, %v396
    %398 = vmatmul.f32.gmra.mxu0 %v66
    %v399 = vpop.f32.mrf.mxu0
    %v400 = vadd.f32 %v301, %v399
    %401 = vdwg.mxu0
    %402 = vmatpush.msra.mxu0 0.0
    %403 = vmatpush.msra.mxu0 0.0
    %404 = vmatpush.msra.mxu0 0.0
    %405 = vmatpush.msra.mxu0 0.0
    %406 = vmatpush.msra.mxu0 0.0
    %407 = vmatpush.msra.mxu0 0.0
    %408 = vmatpush.msra.mxu0 0.0
    %409 = vmatpush.msra.mxu0 0.0
    %410 = vmatpush.msra.mxu0 %v115
    %411 = vmatpush.msra.mxu0 %v113
    %412 = vmatpush.msra.mxu0 %v111
    %413 = vmatpush.msra.mxu0 %v109
    %414 = vmatpush.msra.mxu0 %v107
    %415 = vmatpush.msra.mxu0 %v105
    %416 = vmatpush.msra.mxu0 %v103
    %417 = vmatpush.msra.mxu0 %v101
    %418 = vmatmul.f32.gmra.mxu0 %v304
    %v419 = vpop.f32.mrf.mxu0
    %v420 = vadd.f32 %v391, %v419
    %421 = vmatmul.f32.gmra.mxu0 %v307
    %v422 = vpop.f32.mrf.mxu0
    %v423 = vadd.f32 %v394, %v422
    %424 = vmatmul.f32.gmra.mxu0 %v310
    %v425 = vpop.f32.mrf.mxu0
    %v426 = vadd.f32 %v397, %v425
    %427 = vmatmul.f32.gmra.mxu0 %v313
    %v428 = vpop.f32.mrf.mxu0
    %v429 = vadd.f32 %v400, %v428
    %430 = vdwg.mxu0
    %v431 = vmax.f32 %v60, %v117
    %v432 = vmax.f32 %v61, %v118
    %v433 = vmax.f32 %v62, %v119
    %v434 = vmax.f32 %v63, %v120
    %v435 = vmax.f32 %v64, %v121
    %v436 = vmax.f32 %v65, %v122
    %v437 = vmax.f32 %v66, %v123
    %v438 = vmax.f32 %v67, %v124
    %s439 = scalar_lea.vmem [#allocation2], 128
    %v440 = vld [vmem:[%s439] sm:$0xff]
    %v441 = vld [vmem:[%s439 + $0x8] sm:$0xff]
    %v442 = vld [vmem:[%s439 + $0x10] sm:$0xff]
    %v443 = vld [vmem:[%s439 + $0x18] sm:$0xff]
    %v444 = vld [vmem:[%s439 + $0x20] sm:$0xff]
    %v445 = vld [vmem:[%s439 + $0x28] sm:$0xff]
    %v446 = vld [vmem:[%s439 + $0x30] sm:$0xff]
    %v447 = vld [vmem:[%s439 + $0x38] sm:$0xff]
    %s448 = scalar_lea.vmem [#allocation5], 768
    %v449 = vld [vmem:[%s448] sm:$0xff]
    %v450 = vld [vmem:[%s448 + $0x8] sm:$0xff]
    %v451 = vld [vmem:[%s448 + $0x10] sm:$0xff]
    %v452 = vld [vmem:[%s448 + $0x18] sm:$0xff]
    %v453 = vld [vmem:[%s448 + $0x20] sm:$0xff]
    %v454 = vld [vmem:[%s448 + $0x28] sm:$0xff]
    %v455 = vld [vmem:[%s448 + $0x30] sm:$0xff]
    %v456 = vld [vmem:[%s448 + $0x38] sm:$0xff]
    %v457 = vld [vmem:[%s448 + $0x40] sm:$0xff]
    %v458 = vld [vmem:[%s448 + $0x48] sm:$0xff]
    %v459 = vld [vmem:[%s448 + $0x50] sm:$0xff]
    %v460 = vld [vmem:[%s448 + $0x58] sm:$0xff]
    %v461 = vld [vmem:[%s448 + $0x60] sm:$0xff]
    %v462 = vld [vmem:[%s448 + $0x68] sm:$0xff]
    %v463 = vld [vmem:[%s448 + $0x70] sm:$0xff]
    %v464 = vld [vmem:[%s448 + $0x78] sm:$0xff]
    %v465 = vld [vmem:[%s448 + $0x80] sm:$0xff]
    %v466 = vld [vmem:[%s448 + $0x88] sm:$0xff]
    %v467 = vld [vmem:[%s448 + $0x90] sm:$0xff]
    %v468 = vld [vmem:[%s448 + $0x98] sm:$0xff]
    %v469 = vld [vmem:[%s448 + $0xa0] sm:$0xff]
    %v470 = vld [vmem:[%s448 + $0xa8] sm:$0xff]
    %v471 = vld [vmem:[%s448 + $0xb0] sm:$0xff]
    %v472 = vld [vmem:[%s448 + $0xb8] sm:$0xff]
    %v473 = vld [vmem:[%s448 + $0xc0] sm:$0xff]
    %v474 = vld [vmem:[%s448 + $0xc8] sm:$0xff]
    %v475 = vld [vmem:[%s448 + $0xd0] sm:$0xff]
    %v476 = vld [vmem:[%s448 + $0xd8] sm:$0xff]
    %v477 = vld [vmem:[%s448 + $0xe0] sm:$0xff]
    %v478 = vld [vmem:[%s448 + $0xe8] sm:$0xff]
    %v479 = vld [vmem:[%s448 + $0xf0] sm:$0xff]
    %v480 = vld [vmem:[%s448 + $0xf8] sm:$0xff]
    %v481 = vld [vmem:[%s448 + $0x100] sm:$0xff]
    %v482 = vld [vmem:[%s448 + $0x108] sm:$0xff]
    %v483 = vld [vmem:[%s448 + $0x110] sm:$0xff]
    %v484 = vld [vmem:[%s448 + $0x118] sm:$0xff]
    %v485 = vld [vmem:[%s448 + $0x120] sm:$0xff]
    %v486 = vld [vmem:[%s448 + $0x128] sm:$0xff]
    %v487 = vld [vmem:[%s448 + $0x130] sm:$0xff]
    %v488 = vld [vmem:[%s448 + $0x138] sm:$0xff]
    %v489 = vld [vmem:[%s448 + $0x140] sm:$0xff]
    %v490 = vld [vmem:[%s448 + $0x148] sm:$0xff]
    %v491 = vld [vmem:[%s448 + $0x150] sm:$0xff]
    %v492 = vld [vmem:[%s448 + $0x158] sm:$0xff]
    %v493 = vld [vmem:[%s448 + $0x160] sm:$0xff]
    %v494 = vld [vmem:[%s448 + $0x168] sm:$0xff]
    %v495 = vld [vmem:[%s448 + $0x170] sm:$0xff]
    %v496 = vld [vmem:[%s448 + $0x178] sm:$0xff]
    %v498 = vsel %vm174, %v441, 0
    %v501 = vsel %vm174, %v443, 0
    %v504 = vsel %vm174, %v445, 0
    %v507 = vsel %vm174, %v447, 0
    %509 = vmatpush.msra.mxu0 %v479
    %510 = vmatpush.msra.mxu0 %v477
    %511 = vmatpush.msra.mxu0 %v475
    %512 = vmatpush.msra.mxu0 %v473
    %513 = vmatpush.msra.mxu0 %v471
    %514 = vmatpush.msra.mxu0 %v469
    %515 = vmatpush.msra.mxu0 %v467
    %516 = vmatpush.msra.mxu0 %v465
    %517 = vmatpush.msra.mxu0 %v463
    %518 = vmatpush.msra.mxu0 %v461
    %519 = vmatpush.msra.mxu0 %v459
    %520 = vmatpush.msra.mxu0 %v457
    %521 = vmatpush.msra.mxu0 %v455
    %522 = vmatpush.msra.mxu0 %v453
    %523 = vmatpush.msra.mxu0 %v451
    %524 = vmatpush.msra.mxu0 %v449
    %525 = vmatmul.f32.gmra.mxu0 %v440
    %v526 = vpop.f32.mrf.mxu0
    %v527 = vadd.f32 0.0, %v526
    %528 = vmatmul.f32.gmra.mxu0 %v442
    %v529 = vpop.f32.mrf.mxu0
    %v530 = vadd.f32 0.0, %v529
    %531 = vmatmul.f32.gmra.mxu0 %v444
    %v532 = vpop.f32.mrf.mxu0
    %v533 = vadd.f32 0.0, %v532
    %534 = vmatmul.f32.gmra.mxu0 %v446
    %v535 = vpop.f32.mrf.mxu0
    %v536 = vadd.f32 0.0, %v535
    %537 = vdwg.mxu0
    %538 = vmatpush.msra.mxu0 0.0
    %539 = vmatpush.msra.mxu0 0.0
    %540 = vmatpush.msra.mxu0 0.0
    %541 = vmatpush.msra.mxu0 0.0
    %542 = vmatpush.msra.mxu0 0.0
    %543 = vmatpush.msra.mxu0 0.0
    %544 = vmatpush.msra.mxu0 0.0
    %545 = vmatpush.msra.mxu0 0.0
    %546 = vmatpush.msra.mxu0 %v495
    %547 = vmatpush.msra.mxu0 %v493
    %548 = vmatpush.msra.mxu0 %v491
    %549 = vmatpush.msra.mxu0 %v489
    %550 = vmatpush.msra.mxu0 %v487
    %551 = vmatpush.msra.mxu0 %v485
    %552 = vmatpush.msra.mxu0 %v483
    %553 = vmatpush.msra.mxu0 %v481
    %554 = vmatmul.f32.gmra.mxu0 %v498
    %v555 = vpop.f32.mrf.mxu0
    %v556 = vadd.f32 %v527, %v555
    %557 = vmatmul.f32.gmra.mxu0 %v501
    %v558 = vpop.f32.mrf.mxu0
    %v559 = vadd.f32 %v530, %v558
    %560 = vmatmul.f32.gmra.mxu0 %v504
    %v561 = vpop.f32.mrf.mxu0
    %v562 = vadd.f32 %v533, %v561
    %563 = vmatmul.f32.gmra.mxu0 %v507
    %v564 = vpop.f32.mrf.mxu0
    %v565 = vadd.f32 %v536, %v564
    %566 = vdwg.mxu0
    %567 = vmatpush.msra.mxu0 %v480
    %568 = vmatpush.msra.mxu0 %v478
    %569 = vmatpush.msra.mxu0 %v476
    %570 = vmatpush.msra.mxu0 %v474
    %571 = vmatpush.msra.mxu0 %v472
    %572 = vmatpush.msra.mxu0 %v470
    %573 = vmatpush.msra.mxu0 %v468
    %574 = vmatpush.msra.mxu0 %v466
    %575 = vmatpush.msra.mxu0 %v464
    %576 = vmatpush.msra.mxu0 %v462
    %577 = vmatpush.msra.mxu0 %v460
    %578 = vmatpush.msra.mxu0 %v458
    %579 = vmatpush.msra.mxu0 %v456
    %580 = vmatpush.msra.mxu0 %v454
    %581 = vmatpush.msra.mxu0 %v452
    %582 = vmatpush.msra.mxu0 %v450
    %583 = vmatmul.f32.gmra.mxu0 %v440
    %v584 = vpop.f32.mrf.mxu0
    %v585 = vadd.f32 0.0, %v584
    %586 = vmatmul.f32.gmra.mxu0 %v442
    %v587 = vpop.f32.mrf.mxu0
    %v588 = vadd.f32 0.0, %v587
    %589 = vmatmul.f32.gmra.mxu0 %v444
    %v590 = vpop.f32.mrf.mxu0
    %v591 = vadd.f32 0.0, %v590
    %592 = vmatmul.f32.gmra.mxu0 %v446
    %v593 = vpop.f32.mrf.mxu0
    %v594 = vadd.f32 0.0, %v593
    %595 = vdwg.mxu0
    %596 = vmatpush.msra.mxu0 0.0
    %597 = vmatpush.msra.mxu0 0.0
    %598 = vmatpush.msra.mxu0 0.0
    %599 = vmatpush.msra.mxu0 0.0
    %600 = vmatpush.msra.mxu0 0.0
    %601 = vmatpush.msra.mxu0 0.0
    %602 = vmatpush.msra.mxu0 0.0
    %603 = vmatpush.msra.mxu0 0.0
    %604 = vmatpush.msra.mxu0 %v496
    %605 = vmatpush.msra.mxu0 %v494
    %606 = vmatpush.msra.mxu0 %v492
    %607 = vmatpush.msra.mxu0 %v490
    %608 = vmatpush.msra.mxu0 %v488
    %609 = vmatpush.msra.mxu0 %v486
    %610 = vmatpush.msra.mxu0 %v484
    %611 = vmatpush.msra.mxu0 %v482
    %612 = vmatmul.f32.gmra.mxu0 %v498
    %v613 = vpop.f32.mrf.mxu0
    %v614 = vadd.f32 %v585, %v613
    %615 = vmatmul.f32.gmra.mxu0 %v501
    %v616 = vpop.f32.mrf.mxu0
    %v617 = vadd.f32 %v588, %v616
    %618 = vmatmul.f32.gmra.mxu0 %v504
    %v619 = vpop.f32.mrf.mxu0
    %v620 = vadd.f32 %v591, %v619
    %621 = vmatmul.f32.gmra.mxu0 %v507
    %v622 = vpop.f32.mrf.mxu0
    %v623 = vadd.f32 %v594, %v622
    %624 = vdwg.mxu0
    %v625 = vadd.f32 %v362, %v556
    %v626 = vadd.f32 %v420, %v614
    %v627 = vadd.f32 %v365, %v559
    %v628 = vadd.f32 %v423, %v617
    %v629 = vadd.f32 %v368, %v562
    %v630 = vadd.f32 %v426, %v620
    %v631 = vadd.f32 %v371, %v565
    %v632 = vadd.f32 %v429, %v623
    %v633 = vmax.f32 %v431, %v440
    %v634 = vmax.f32 %v432, %v441
    %v635 = vmax.f32 %v433, %v442
    %v636 = vmax.f32 %v434, %v443
    %v637 = vmax.f32 %v435, %v444
    %v638 = vmax.f32 %v436, %v445
    %v639 = vmax.f32 %v437, %v446
    %v640 = vmax.f32 %v438, %v447
    %s641 = scalar_lea.vmem [#allocation2], 192
    %v642 = vld [vmem:[%s641] sm:$0xff]
    %v643 = vld [vmem:[%s641 + $0x8] sm:$0xff]
    %v644 = vld [vmem:[%s641 + $0x10] sm:$0xff]
    %v645 = vld [vmem:[%s641 + $0x18] sm:$0xff]
    %v646 = vld [vmem:[%s641 + $0x20] sm:$0xff]
    %v647 = vld [vmem:[%s641 + $0x28] sm:$0xff]
    %v648 = vld [vmem:[%s641 + $0x30] sm:$0xff]
    %v649 = vld [vmem:[%s641 + $0x38] sm:$0xff]
    %s650 = scalar_lea.vmem [#allocation5], 1152
    %v651 = vld [vmem:[%s650] sm:$0xff]
    %v652 = vld [vmem:[%s650 + $0x8] sm:$0xff]
    %v653 = vld [vmem:[%s650 + $0x10] sm:$0xff]
    %v654 = vld [vmem:[%s650 + $0x18] sm:$0xff]
    %v655 = vld [vmem:[%s650 + $0x20] sm:$0xff]
    %v656 = vld [vmem:[%s650 + $0x28] sm:$0xff]
    %v657 = vld [vmem:[%s650 + $0x30] sm:$0xff]
    %v658 = vld [vmem:[%s650 + $0x38] sm:$0xff]
    %v659 = vld [vmem:[%s650 + $0x40] sm:$0xff]
    %v660 = vld [vmem:[%s650 + $0x48] sm:$0xff]
    %v661 = vld [vmem:[%s650 + $0x50] sm:$0xff]
    %v662 = vld [vmem:[%s650 + $0x58] sm:$0xff]
    %v663 = vld [vmem:[%s650 + $0x60] sm:$0xff]
    %v664 = vld [vmem:[%s650 + $0x68] sm:$0xff]
    %v665 = vld [vmem:[%s650 + $0x70] sm:$0xff]
    %v666 = vld [vmem:[%s650 + $0x78] sm:$0xff]
    %v667 = vld [vmem:[%s650 + $0x80] sm:$0xff]
    %v668 = vld [vmem:[%s650 + $0x88] sm:$0xff]
    %v669 = vld [vmem:[%s650 + $0x90] sm:$0xff]
    %v670 = vld [vmem:[%s650 + $0x98] sm:$0xff]
    %v671 = vld [vmem:[%s650 + $0xa0] sm:$0xff]
    %v672 = vld [vmem:[%s650 + $0xa8] sm:$0xff]
    %v673 = vld [vmem:[%s650 + $0xb0] sm:$0xff]
    %v674 = vld [vmem:[%s650 + $0xb8] sm:$0xff]
    %v675 = vld [vmem:[%s650 + $0xc0] sm:$0xff]
    %v676 = vld [vmem:[%s650 + $0xc8] sm:$0xff]
    %v677 = vld [vmem:[%s650 + $0xd0] sm:$0xff]
    %v678 = vld [vmem:[%s650 + $0xd8] sm:$0xff]
    %v679 = vld [vmem:[%s650 + $0xe0] sm:$0xff]
    %v680 = vld [vmem:[%s650 + $0xe8] sm:$0xff]
    %v681 = vld [vmem:[%s650 + $0xf0] sm:$0xff]
    %v682 = vld [vmem:[%s650 + $0xf8] sm:$0xff]
    %v683 = vld [vmem:[%s650 + $0x100] sm:$0xff]
    %v684 = vld [vmem:[%s650 + $0x108] sm:$0xff]
    %v685 = vld [vmem:[%s650 + $0x110] sm:$0xff]
    %v686 = vld [vmem:[%s650 + $0x118] sm:$0xff]
    %v687 = vld [vmem:[%s650 + $0x120] sm:$0xff]
    %v688 = vld [vmem:[%s650 + $0x128] sm:$0xff]
    %v689 = vld [vmem:[%s650 + $0x130] sm:$0xff]
    %v690 = vld [vmem:[%s650 + $0x138] sm:$0xff]
    %v691 = vld [vmem:[%s650 + $0x140] sm:$0xff]
    %v692 = vld [vmem:[%s650 + $0x148] sm:$0xff]
    %v693 = vld [vmem:[%s650 + $0x150] sm:$0xff]
    %v694 = vld [vmem:[%s650 + $0x158] sm:$0xff]
    %v695 = vld [vmem:[%s650 + $0x160] sm:$0xff]
    %v696 = vld [vmem:[%s650 + $0x168] sm:$0xff]
    %v697 = vld [vmem:[%s650 + $0x170] sm:$0xff]
    %v698 = vld [vmem:[%s650 + $0x178] sm:$0xff]
    %v700 = vsel %vm174, %v643, 0
    %v703 = vsel %vm174, %v645, 0
    %v706 = vsel %vm174, %v647, 0
    %v709 = vsel %vm174, %v649, 0
    %711 = vmatpush.msra.mxu0 %v681
    %712 = vmatpush.msra.mxu0 %v679
    %713 = vmatpush.msra.mxu0 %v677
    %714 = vmatpush.msra.mxu0 %v675
    %715 = vmatpush.msra.mxu0 %v673
    %716 = vmatpush.msra.mxu0 %v671
    %717 = vmatpush.msra.mxu0 %v669
    %718 = vmatpush.msra.mxu0 %v667
    %719 = vmatpush.msra.mxu0 %v665
    %720 = vmatpush.msra.mxu0 %v663
    %721 = vmatpush.msra.mxu0 %v661
    %722 = vmatpush.msra.mxu0 %v659
    %723 = vmatpush.msra.mxu0 %v657
    %724 = vmatpush.msra.mxu0 %v655
    %725 = vmatpush.msra.mxu0 %v653
    %726 = vmatpush.msra.mxu0 %v651
    %727 = vmatmul.f32.gmra.mxu0 %v642
    %v728 = vpop.f32.mrf.mxu0
    %v729 = vadd.f32 0.0, %v728
    %730 = vmatmul.f32.gmra.mxu0 %v644
    %v731 = vpop.f32.mrf.mxu0
    %v732 = vadd.f32 0.0, %v731
    %733 = vmatmul.f32.gmra.mxu0 %v646
    %v734 = vpop.f32.mrf.mxu0
    %v735 = vadd.f32 0.0, %v734
    %736 = vmatmul.f32.gmra.mxu0 %v648
    %v737 = vpop.f32.mrf.mxu0
    %v738 = vadd.f32 0.0, %v737
    %739 = vdwg.mxu0
    %740 = vmatpush.msra.mxu0 0.0
    %741 = vmatpush.msra.mxu0 0.0
    %742 = vmatpush.msra.mxu0 0.0
    %743 = vmatpush.msra.mxu0 0.0
    %744 = vmatpush.msra.mxu0 0.0
    %745 = vmatpush.msra.mxu0 0.0
    %746 = vmatpush.msra.mxu0 0.0
    %747 = vmatpush.msra.mxu0 0.0
    %748 = vmatpush.msra.mxu0 %v697
    %749 = vmatpush.msra.mxu0 %v695
    %750 = vmatpush.msra.mxu0 %v693
    %751 = vmatpush.msra.mxu0 %v691
    %752 = vmatpush.msra.mxu0 %v689
    %753 = vmatpush.msra.mxu0 %v687
    %754 = vmatpush.msra.mxu0 %v685
    %755 = vmatpush.msra.mxu0 %v683
    %756 = vmatmul.f32.gmra.mxu0 %v700
    %v757 = vpop.f32.mrf.mxu0
    %v758 = vadd.f32 %v729, %v757
    %759 = vmatmul.f32.gmra.mxu0 %v703
    %v760 = vpop.f32.mrf.mxu0
    %v761 = vadd.f32 %v732, %v760
    %762 = vmatmul.f32.gmra.mxu0 %v706
    %v763 = vpop.f32.mrf.mxu0
    %v764 = vadd.f32 %v735, %v763
    %765 = vmatmul.f32.gmra.mxu0 %v709
    %v766 = vpop.f32.mrf.mxu0
    %v767 = vadd.f32 %v738, %v766
    %768 = vdwg.mxu0
    %769 = vmatpush.msra.mxu0 %v682
    %770 = vmatpush.msra.mxu0 %v680
    %771 = vmatpush.msra.mxu0 %v678
    %772 = vmatpush.msra.mxu0 %v676
    %773 = vmatpush.msra.mxu0 %v674
    %774 = vmatpush.msra.mxu0 %v672
    %775 = vmatpush.msra.mxu0 %v670
    %776 = vmatpush.msra.mxu0 %v668
    %777 = vmatpush.msra.mxu0 %v666
    %778 = vmatpush.msra.mxu0 %v664
    %779 = vmatpush.msra.mxu0 %v662
    %780 = vmatpush.msra.mxu0 %v660
    %781 = vmatpush.msra.mxu0 %v658
    %782 = vmatpush.msra.mxu0 %v656
    %783 = vmatpush.msra.mxu0 %v654
    %784 = vmatpush.msra.mxu0 %v652
    %785 = vmatmul.f32.gmra.mxu0 %v642
    %v786 = vpop.f32.mrf.mxu0
    %v787 = vadd.f32 0.0, %v786
    %788 = vmatmul.f32.gmra.mxu0 %v644
    %v789 = vpop.f32.mrf.mxu0
    %v790 = vadd.f32 0.0, %v789
    %791 = vmatmul.f32.gmra.mxu0 %v646
    %v792 = vpop.f32.mrf.mxu0
    %v793 = vadd.f32 0.0, %v792
    %794 = vmatmul.f32.gmra.mxu0 %v648
    %v795 = vpop.f32.mrf.mxu0
    %v796 = vadd.f32 0.0, %v795
    %797 = vdwg.mxu0
    %798 = vmatpush.msra.mxu0 0.0
    %799 = vmatpush.msra.mxu0 0.0
    %800 = vmatpush.msra.mxu0 0.0
    %801 = vmatpush.msra.mxu0 0.0
    %802 = vmatpush.msra.mxu0 0.0
    %803 = vmatpush.msra.mxu0 0.0
    %804 = vmatpush.msra.mxu0 0.0
    %805 = vmatpush.msra.mxu0 0.0
    %806 = vmatpush.msra.mxu0 %v698
    %807 = vmatpush.msra.mxu0 %v696
    %808 = vmatpush.msra.mxu0 %v694
    %809 = vmatpush.msra.mxu0 %v692
    %810 = vmatpush.msra.mxu0 %v690
    %811 = vmatpush.msra.mxu0 %v688
    %812 = vmatpush.msra.mxu0 %v686
    %813 = vmatpush.msra.mxu0 %v684
    %814 = vmatmul.f32.gmra.mxu0 %v700
    %v815 = vpop.f32.mrf.mxu0
    %v816 = vadd.f32 %v787, %v815
    %817 = vmatmul.f32.gmra.mxu0 %v703
    %v818 = vpop.f32.mrf.mxu0
    %v819 = vadd.f32 %v790, %v818
    %820 = vmatmul.f32.gmra.mxu0 %v706
    %v821 = vpop.f32.mrf.mxu0
    %v822 = vadd.f32 %v793, %v821
    %823 = vmatmul.f32.gmra.mxu0 %v709
    %v824 = vpop.f32.mrf.mxu0
    %v825 = vadd.f32 %v796, %v824
    %826 = vdwg.mxu0
    %v827 = vadd.f32 %v625, %v758
    %v828 = vadd.f32 %v626, %v816
    %v829 = vadd.f32 %v627, %v761
    %v830 = vadd.f32 %v628, %v819
    %v831 = vadd.f32 %v629, %v764
    %v832 = vadd.f32 %v630, %v822
    %v833 = vadd.f32 %v631, %v767
    %v834 = vadd.f32 %v632, %v825
    %v835 = vmax.f32 %v633, %v642
    %v836 = vmax.f32 %v634, %v643
    %v837 = vmax.f32 %v635, %v644
    %v838 = vmax.f32 %v636, %v645
    %v839 = vmax.f32 %v637, %v646
    %v840 = vmax.f32 %v638, %v647
    %v841 = vmax.f32 %v639, %v648
    %v842 = vmax.f32 %v640, %v649
    %s843 = scalar_lea.vmem [#allocation2], 256
    %v844 = vld [vmem:[%s843] sm:$0xff]
    %v845 = vld [vmem:[%s843 + $0x8] sm:$0xff]
    %v846 = vld [vmem:[%s843 + $0x10] sm:$0xff]
    %v847 = vld [vmem:[%s843 + $0x18] sm:$0xff]
    %v848 = vld [vmem:[%s843 + $0x20] sm:$0xff]
    %v849 = vld [vmem:[%s843 + $0x28] sm:$0xff]
    %v850 = vld [vmem:[%s843 + $0x30] sm:$0xff]
    %v851 = vld [vmem:[%s843 + $0x38] sm:$0xff]
    %s852 = scalar_lea.vmem [#allocation5], 1536
    %v853 = vld [vmem:[%s852] sm:$0xff]
    %v854 = vld [vmem:[%s852 + $0x8] sm:$0xff]
    %v855 = vld [vmem:[%s852 + $0x10] sm:$0xff]
    %v856 = vld [vmem:[%s852 + $0x18] sm:$0xff]
    %v857 = vld [vmem:[%s852 + $0x20] sm:$0xff]
    %v858 = vld [vmem:[%s852 + $0x28] sm:$0xff]
    %v859 = vld [vmem:[%s852 + $0x30] sm:$0xff]
    %v860 = vld [vmem:[%s852 + $0x38] sm:$0xff]
    %v861 = vld [vmem:[%s852 + $0x40] sm:$0xff]
    %v862 = vld [vmem:[%s852 + $0x48] sm:$0xff]
    %v863 = vld [vmem:[%s852 + $0x50] sm:$0xff]
    %v864 = vld [vmem:[%s852 + $0x58] sm:$0xff]
    %v865 = vld [vmem:[%s852 + $0x60] sm:$0xff]
    %v866 = vld [vmem:[%s852 + $0x68] sm:$0xff]
    %v867 = vld [vmem:[%s852 + $0x70] sm:$0xff]
    %v868 = vld [vmem:[%s852 + $0x78] sm:$0xff]
    %v869 = vld [vmem:[%s852 + $0x80] sm:$0xff]
    %v870 = vld [vmem:[%s852 + $0x88] sm:$0xff]
    %v871 = vld [vmem:[%s852 + $0x90] sm:$0xff]
    %v872 = vld [vmem:[%s852 + $0x98] sm:$0xff]
    %v873 = vld [vmem:[%s852 + $0xa0] sm:$0xff]
    %v874 = vld [vmem:[%s852 + $0xa8] sm:$0xff]
    %v875 = vld [vmem:[%s852 + $0xb0] sm:$0xff]
    %v876 = vld [vmem:[%s852 + $0xb8] sm:$0xff]
    %v877 = vld [vmem:[%s852 + $0xc0] sm:$0xff]
    %v878 = vld [vmem:[%s852 + $0xc8] sm:$0xff]
    %v879 = vld [vmem:[%s852 + $0xd0] sm:$0xff]
    %v880 = vld [vmem:[%s852 + $0xd8] sm:$0xff]
    %v881 = vld [vmem:[%s852 + $0xe0] sm:$0xff]
    %v882 = vld [vmem:[%s852 + $0xe8] sm:$0xff]
    %v883 = vld [vmem:[%s852 + $0xf0] sm:$0xff]
    %v884 = vld [vmem:[%s852 + $0xf8] sm:$0xff]
    %v885 = vld [vmem:[%s852 + $0x100] sm:$0xff]
    %v886 = vld [vmem:[%s852 + $0x108] sm:$0xff]
    %v887 = vld [vmem:[%s852 + $0x110] sm:$0xff]
    %v888 = vld [vmem:[%s852 + $0x118] sm:$0xff]
    %v889 = vld [vmem:[%s852 + $0x120] sm:$0xff]
    %v890 = vld [vmem:[%s852 + $0x128] sm:$0xff]
    %v891 = vld [vmem:[%s852 + $0x130] sm:$0xff]
    %v892 = vld [vmem:[%s852 + $0x138] sm:$0xff]
    %v893 = vld [vmem:[%s852 + $0x140] sm:$0xff]
    %v894 = vld [vmem:[%s852 + $0x148] sm:$0xff]
    %v895 = vld [vmem:[%s852 + $0x150] sm:$0xff]
    %v896 = vld [vmem:[%s852 + $0x158] sm:$0xff]
    %v897 = vld [vmem:[%s852 + $0x160] sm:$0xff]
    %v898 = vld [vmem:[%s852 + $0x168] sm:$0xff]
    %v899 = vld [vmem:[%s852 + $0x170] sm:$0xff]
    %v900 = vld [vmem:[%s852 + $0x178] sm:$0xff]
    %v902 = vsel %vm174, %v845, 0
    %v905 = vsel %vm174, %v847, 0
    %v908 = vsel %vm174, %v849, 0
    %v911 = vsel %vm174, %v851, 0
    %913 = vmatpush.msra.mxu0 %v883
    %914 = vmatpush.msra.mxu0 %v881
    %915 = vmatpush.msra.mxu0 %v879
    %916 = vmatpush.msra.mxu0 %v877
    %917 = vmatpush.msra.mxu0 %v875
    %918 = vmatpush.msra.mxu0 %v873
    %919 = vmatpush.msra.mxu0 %v871
    %920 = vmatpush.msra.mxu0 %v869
    %921 = vmatpush.msra.mxu0 %v867
    %922 = vmatpush.msra.mxu0 %v865
    %923 = vmatpush.msra.mxu0 %v863
    %924 = vmatpush.msra.mxu0 %v861
    %925 = vmatpush.msra.mxu0 %v859
    %926 = vmatpush.msra.mxu0 %v857
    %927 = vmatpush.msra.mxu0 %v855
    %928 = vmatpush.msra.mxu0 %v853
    %929 = vmatmul.f32.gmra.mxu0 %v844
    %v930 = vpop.f32.mrf.mxu0
    %v931 = vadd.f32 0.0, %v930
    %932 = vmatmul.f32.gmra.mxu0 %v846
    %v933 = vpop.f32.mrf.mxu0
    %v934 = vadd.f32 0.0, %v933
    %935 = vmatmul.f32.gmra.mxu0 %v848
    %v936 = vpop.f32.mrf.mxu0
    %v937 = vadd.f32 0.0, %v936
    %938 = vmatmul.f32.gmra.mxu0 %v850
    %v939 = vpop.f32.mrf.mxu0
    %v940 = vadd.f32 0.0, %v939
    %941 = vdwg.mxu0
    %942 = vmatpush.msra.mxu0 0.0
    %943 = vmatpush.msra.mxu0 0.0
    %944 = vmatpush.msra.mxu0 0.0
    %945 = vmatpush.msra.mxu0 0.0
    %946 = vmatpush.msra.mxu0 0.0
    %947 = vmatpush.msra.mxu0 0.0
    %948 = vmatpush.msra.mxu0 0.0
    %949 = vmatpush.msra.mxu0 0.0
    %950 = vmatpush.msra.mxu0 %v899
    %951 = vmatpush.msra.mxu0 %v897
    %952 = vmatpush.msra.mxu0 %v895
    %953 = vmatpush.msra.mxu0 %v893
    %954 = vmatpush.msra.mxu0 %v891
    %955 = vmatpush.msra.mxu0 %v889
    %956 = vmatpush.msra.mxu0 %v887
    %957 = vmatpush.msra.mxu0 %v885
    %958 = vmatmul.f32.gmra.mxu0 %v902
    %v959 = vpop.f32.mrf.mxu0
    %v960 = vadd.f32 %v931, %v959
    %961 = vmatmul.f32.gmra.mxu0 %v905
    %v962 = vpop.f32.mrf.mxu0
    %v963 = vadd.f32 %v934, %v962
    %964 = vmatmul.f32.gmra.mxu0 %v908
    %v965 = vpop.f32.mrf.mxu0
    %v966 = vadd.f32 %v937, %v965
    %967 = vmatmul.f32.gmra.mxu0 %v911
    %v968 = vpop.f32.mrf.mxu0
    %v969 = vadd.f32 %v940, %v968
    %970 = vdwg.mxu0
    %971 = vmatpush.msra.mxu0 %v884
    %972 = vmatpush.msra.mxu0 %v882
    %973 = vmatpush.msra.mxu0 %v880
    %974 = vmatpush.msra.mxu0 %v878
    %975 = vmatpush.msra.mxu0 %v876
    %976 = vmatpush.msra.mxu0 %v874
    %977 = vmatpush.msra.mxu0 %v872
    %978 = vmatpush.msra.mxu0 %v870
    %979 = vmatpush.msra.mxu0 %v868
    %980 = vmatpush.msra.mxu0 %v866
    %981 = vmatpush.msra.mxu0 %v864
    %982 = vmatpush.msra.mxu0 %v862
    %983 = vmatpush.msra.mxu0 %v860
    %984 = vmatpush.msra.mxu0 %v858
    %985 = vmatpush.msra.mxu0 %v856
    %986 = vmatpush.msra.mxu0 %v854
    %987 = vmatmul.f32.gmra.mxu0 %v844
    %v988 = vpop.f32.mrf.mxu0
    %v989 = vadd.f32 0.0, %v988
    %990 = vmatmul.f32.gmra.mxu0 %v846
    %v991 = vpop.f32.mrf.mxu0
    %v992 = vadd.f32 0.0, %v991
    %993 = vmatmul.f32.gmra.mxu0 %v848
    %v994 = vpop.f32.mrf.mxu0
    %v995 = vadd.f32 0.0, %v994
    %996 = vmatmul.f32.gmra.mxu0 %v850
    %v997 = vpop.f32.mrf.mxu0
    %v998 = vadd.f32 0.0, %v997
    %999 = vdwg.mxu0
    %1000 = vmatpush.msra.mxu0 0.0
    %1001 = vmatpush.msra.mxu0 0.0
    %1002 = vmatpush.msra.mxu0 0.0
    %1003 = vmatpush.msra.mxu0 0.0
    %1004 = vmatpush.msra.mxu0 0.0
    %1005 = vmatpush.msra.mxu0 0.0
    %1006 = vmatpush.msra.mxu0 0.0
    %1007 = vmatpush.msra.mxu0 0.0
    %1008 = vmatpush.msra.mxu0 %v900
    %1009 = vmatpush.msra.mxu0 %v898
    %1010 = vmatpush.msra.mxu0 %v896
    %1011 = vmatpush.msra.mxu0 %v894
    %1012 = vmatpush.msra.mxu0 %v892
    %1013 = vmatpush.msra.mxu0 %v890
    %1014 = vmatpush.msra.mxu0 %v888
    %1015 = vmatpush.msra.mxu0 %v886
    %1016 = vmatmul.f32.gmra.mxu0 %v902
    %v1017 = vpop.f32.mrf.mxu0
    %v1018 = vadd.f32 %v989, %v1017
    %1019 = vmatmul.f32.gmra.mxu0 %v905
    %v1020 = vpop.f32.mrf.mxu0
    %v1021 = vadd.f32 %v992, %v1020
    %1022 = vmatmul.f32.gmra.mxu0 %v908
    %v1023 = vpop.f32.mrf.mxu0
    %v1024 = vadd.f32 %v995, %v1023
    %1025 = vmatmul.f32.gmra.mxu0 %v911
    %v1026 = vpop.f32.mrf.mxu0
    %v1027 = vadd.f32 %v998, %v1026
    %1028 = vdwg.mxu0
    %v1029 = vadd.f32 %v827, %v960
    %v1030 = vadd.f32 %v828, %v1018
    %v1031 = vadd.f32 %v829, %v963
    %v1032 = vadd.f32 %v830, %v1021
    %v1033 = vadd.f32 %v831, %v966
    %v1034 = vadd.f32 %v832, %v1024
    %v1035 = vadd.f32 %v833, %v969
    %v1036 = vadd.f32 %v834, %v1027
    %v1037 = vmax.f32 %v835, %v844
    %v1038 = vmax.f32 %v836, %v845
    %v1039 = vmax.f32 %v837, %v846
    %v1040 = vmax.f32 %v838, %v847
    %v1041 = vmax.f32 %v839, %v848
    %v1042 = vmax.f32 %v840, %v849
    %v1043 = vmax.f32 %v841, %v850
    %v1044 = vmax.f32 %v842, %v851
    %s1045 = scalar_lea.vmem [#allocation2], 320
    %v1046 = vld [vmem:[%s1045] sm:$0xff]
    %v1047 = vld [vmem:[%s1045 + $0x8] sm:$0xff]
    %v1048 = vld [vmem:[%s1045 + $0x10] sm:$0xff]
    %v1049 = vld [vmem:[%s1045 + $0x18] sm:$0xff]
    %v1050 = vld [vmem:[%s1045 + $0x20] sm:$0xff]
    %v1051 = vld [vmem:[%s1045 + $0x28] sm:$0xff]
    %v1052 = vld [vmem:[%s1045 + $0x30] sm:$0xff]
    %v1053 = vld [vmem:[%s1045 + $0x38] sm:$0xff]
    %s1054 = scalar_lea.vmem [#allocation5], 1920
    %v1055 = vld [vmem:[%s1054] sm:$0xff]
    %v1056 = vld [vmem:[%s1054 + $0x8] sm:$0xff]
    %v1057 = vld [vmem:[%s1054 + $0x10] sm:$0xff]
    %v1058 = vld [vmem:[%s1054 + $0x18] sm:$0xff]
    %v1059 = vld [vmem:[%s1054 + $0x20] sm:$0xff]
    %v1060 = vld [vmem:[%s1054 + $0x28] sm:$0xff]
    %v1061 = vld [vmem:[%s1054 + $0x30] sm:$0xff]
    %v1062 = vld [vmem:[%s1054 + $0x38] sm:$0xff]
    %v1063 = vld [vmem:[%s1054 + $0x40] sm:$0xff]
    %v1064 = vld [vmem:[%s1054 + $0x48] sm:$0xff]
    %v1065 = vld [vmem:[%s1054 + $0x50] sm:$0xff]
    %v1066 = vld [vmem:[%s1054 + $0x58] sm:$0xff]
    %v1067 = vld [vmem:[%s1054 + $0x60] sm:$0xff]
    %v1068 = vld [vmem:[%s1054 + $0x68] sm:$0xff]
    %v1069 = vld [vmem:[%s1054 + $0x70] sm:$0xff]
    %v1070 = vld [vmem:[%s1054 + $0x78] sm:$0xff]
    %v1071 = vld [vmem:[%s1054 + $0x80] sm:$0xff]
    %v1072 = vld [vmem:[%s1054 + $0x88] sm:$0xff]
    %v1073 = vld [vmem:[%s1054 + $0x90] sm:$0xff]
    %v1074 = vld [vmem:[%s1054 + $0x98] sm:$0xff]
    %v1075 = vld [vmem:[%s1054 + $0xa0] sm:$0xff]
    %v1076 = vld [vmem:[%s1054 + $0xa8] sm:$0xff]
    %v1077 = vld [vmem:[%s1054 + $0xb0] sm:$0xff]
    %v1078 = vld [vmem:[%s1054 + $0xb8] sm:$0xff]
    %v1079 = vld [vmem:[%s1054 + $0xc0] sm:$0xff]
    %v1080 = vld [vmem:[%s1054 + $0xc8] sm:$0xff]
    %v1081 = vld [vmem:[%s1054 + $0xd0] sm:$0xff]
    %v1082 = vld [vmem:[%s1054 + $0xd8] sm:$0xff]
    %v1083 = vld [vmem:[%s1054 + $0xe0] sm:$0xff]
    %v1084 = vld [vmem:[%s1054 + $0xe8] sm:$0xff]
    %v1085 = vld [vmem:[%s1054 + $0xf0] sm:$0xff]
    %v1086 = vld [vmem:[%s1054 + $0xf8] sm:$0xff]
    %v1087 = vld [vmem:[%s1054 + $0x100] sm:$0xff]
    %v1088 = vld [vmem:[%s1054 + $0x108] sm:$0xff]
    %v1089 = vld [vmem:[%s1054 + $0x110] sm:$0xff]
    %v1090 = vld [vmem:[%s1054 + $0x118] sm:$0xff]
    %v1091 = vld [vmem:[%s1054 + $0x120] sm:$0xff]
    %v1092 = vld [vmem:[%s1054 + $0x128] sm:$0xff]
    %v1093 = vld [vmem:[%s1054 + $0x130] sm:$0xff]
    %v1094 = vld [vmem:[%s1054 + $0x138] sm:$0xff]
    %v1095 = vld [vmem:[%s1054 + $0x140] sm:$0xff]
    %v1096 = vld [vmem:[%s1054 + $0x148] sm:$0xff]
    %v1097 = vld [vmem:[%s1054 + $0x150] sm:$0xff]
    %v1098 = vld [vmem:[%s1054 + $0x158] sm:$0xff]
    %v1099 = vld [vmem:[%s1054 + $0x160] sm:$0xff]
    %v1100 = vld [vmem:[%s1054 + $0x168] sm:$0xff]
    %v1101 = vld [vmem:[%s1054 + $0x170] sm:$0xff]
    %v1102 = vld [vmem:[%s1054 + $0x178] sm:$0xff]
    %v1104 = vsel %vm174, %v1047, 0
    %v1107 = vsel %vm174, %v1049, 0
    %v1110 = vsel %vm174, %v1051, 0
    %v1113 = vsel %vm174, %v1053, 0
    %1115 = vmatpush.msra.mxu0 %v1085
    %1116 = vmatpush.msra.mxu0 %v1083
    %1117 = vmatpush.msra.mxu0 %v1081
    %1118 = vmatpush.msra.mxu0 %v1079
    %1119 = vmatpush.msra.mxu0 %v1077
    %1120 = vmatpush.msra.mxu0 %v1075
    %1121 = vmatpush.msra.mxu0 %v1073
    %1122 = vmatpush.msra.mxu0 %v1071
    %1123 = vmatpush.msra.mxu0 %v1069
    %1124 = vmatpush.msra.mxu0 %v1067
    %1125 = vmatpush.msra.mxu0 %v1065
    %1126 = vmatpush.msra.mxu0 %v1063
    %1127 = vmatpush.msra.mxu0 %v1061
    %1128 = vmatpush.msra.mxu0 %v1059
    %1129 = vmatpush.msra.mxu0 %v1057
    %1130 = vmatpush.msra.mxu0 %v1055
    %1131 = vmatmul.f32.gmra.mxu0 %v1046
    %v1132 = vpop.f32.mrf.mxu0
    %v1133 = vadd.f32 0.0, %v1132
    %1134 = vmatmul.f32.gmra.mxu0 %v1048
    %v1135 = vpop.f32.mrf.mxu0
    %v1136 = vadd.f32 0.0, %v1135
    %1137 = vmatmul.f32.gmra.mxu0 %v1050
    %v1138 = vpop.f32.mrf.mxu0
    %v1139 = vadd.f32 0.0, %v1138
    %1140 = vmatmul.f32.gmra.mxu0 %v1052
    %v1141 = vpop.f32.mrf.mxu0
    %v1142 = vadd.f32 0.0, %v1141
    %1143 = vdwg.mxu0
    %1144 = vmatpush.msra.mxu0 0.0
    %1145 = vmatpush.msra.mxu0 0.0
    %1146 = vmatpush.msra.mxu0 0.0
    %1147 = vmatpush.msra.mxu0 0.0
    %1148 = vmatpush.msra.mxu0 0.0
    %1149 = vmatpush.msra.mxu0 0.0
    %1150 = vmatpush.msra.mxu0 0.0
    %1151 = vmatpush.msra.mxu0 0.0
    %1152 = vmatpush.msra.mxu0 %v1101
    %1153 = vmatpush.msra.mxu0 %v1099
    %1154 = vmatpush.msra.mxu0 %v1097
    %1155 = vmatpush.msra.mxu0 %v1095
    %1156 = vmatpush.msra.mxu0 %v1093
    %1157 = vmatpush.msra.mxu0 %v1091
    %1158 = vmatpush.msra.mxu0 %v1089
    %1159 = vmatpush.msra.mxu0 %v1087
    %1160 = vmatmul.f32.gmra.mxu0 %v1104
    %v1161 = vpop.f32.mrf.mxu0
    %v1162 = vadd.f32 %v1133, %v1161
    %1163 = vmatmul.f32.gmra.mxu0 %v1107
    %v1164 = vpop.f32.mrf.mxu0
    %v1165 = vadd.f32 %v1136, %v1164
    %1166 = vmatmul.f32.gmra.mxu0 %v1110
    %v1167 = vpop.f32.mrf.mxu0
    %v1168 = vadd.f32 %v1139, %v1167
    %1169 = vmatmul.f32.gmra.mxu0 %v1113
    %v1170 = vpop.f32.mrf.mxu0
    %v1171 = vadd.f32 %v1142, %v1170
    %1172 = vdwg.mxu0
    %1173 = vmatpush.msra.mxu0 %v1086
    %1174 = vmatpush.msra.mxu0 %v1084
    %1175 = vmatpush.msra.mxu0 %v1082
    %1176 = vmatpush.msra.mxu0 %v1080
    %1177 = vmatpush.msra.mxu0 %v1078
    %1178 = vmatpush.msra.mxu0 %v1076
    %1179 = vmatpush.msra.mxu0 %v1074
    %1180 = vmatpush.msra.mxu0 %v1072
    %1181 = vmatpush.msra.mxu0 %v1070
    %1182 = vmatpush.msra.mxu0 %v1068
    %1183 = vmatpush.msra.mxu0 %v1066
    %1184 = vmatpush.msra.mxu0 %v1064
    %1185 = vmatpush.msra.mxu0 %v1062
    %1186 = vmatpush.msra.mxu0 %v1060
    %1187 = vmatpush.msra.mxu0 %v1058
    %1188 = vmatpush.msra.mxu0 %v1056
    %1189 = vmatmul.f32.gmra.mxu0 %v1046
    %v1190 = vpop.f32.mrf.mxu0
    %v1191 = vadd.f32 0.0, %v1190
    %1192 = vmatmul.f32.gmra.mxu0 %v1048
    %v1193 = vpop.f32.mrf.mxu0
    %v1194 = vadd.f32 0.0, %v1193
    %1195 = vmatmul.f32.gmra.mxu0 %v1050
    %v1196 = vpop.f32.mrf.mxu0
    %v1197 = vadd.f32 0.0, %v1196
    %1198 = vmatmul.f32.gmra.mxu0 %v1052
    %v1199 = vpop.f32.mrf.mxu0
    %v1200 = vadd.f32 0.0, %v1199
    %1201 = vdwg.mxu0
    %1202 = vmatpush.msra.mxu0 0.0
    %1203 = vmatpush.msra.mxu0 0.0
    %1204 = vmatpush.msra.mxu0 0.0
    %1205 = vmatpush.msra.mxu0 0.0
    %1206 = vmatpush.msra.mxu0 0.0
    %1207 = vmatpush.msra.mxu0 0.0
    %1208 = vmatpush.msra.mxu0 0.0
    %1209 = vmatpush.msra.mxu0 0.0
    %1210 = vmatpush.msra.mxu0 %v1102
    %1211 = vmatpush.msra.mxu0 %v1100
    %1212 = vmatpush.msra.mxu0 %v1098
    %1213 = vmatpush.msra.mxu0 %v1096
    %1214 = vmatpush.msra.mxu0 %v1094
    %1215 = vmatpush.msra.mxu0 %v1092
    %1216 = vmatpush.msra.mxu0 %v1090
    %1217 = vmatpush.msra.mxu0 %v1088
    %1218 = vmatmul.f32.gmra.mxu0 %v1104
    %v1219 = vpop.f32.mrf.mxu0
    %v1220 = vadd.f32 %v1191, %v1219
    %1221 = vmatmul.f32.gmra.mxu0 %v1107
    %v1222 = vpop.f32.mrf.mxu0
    %v1223 = vadd.f32 %v1194, %v1222
    %1224 = vmatmul.f32.gmra.mxu0 %v1110
    %v1225 = vpop.f32.mrf.mxu0
    %v1226 = vadd.f32 %v1197, %v1225
    %1227 = vmatmul.f32.gmra.mxu0 %v1113
    %v1228 = vpop.f32.mrf.mxu0
    %v1229 = vadd.f32 %v1200, %v1228
    %1230 = vdwg.mxu0
    %v1231 = vadd.f32 %v1029, %v1162
    %v1232 = vadd.f32 %v1030, %v1220
    %v1233 = vadd.f32 %v1031, %v1165
    %v1234 = vadd.f32 %v1032, %v1223
    %v1235 = vadd.f32 %v1033, %v1168
    %v1236 = vadd.f32 %v1034, %v1226
    %v1237 = vadd.f32 %v1035, %v1171
    %v1238 = vadd.f32 %v1036, %v1229
    %v1239 = vmax.f32 %v1037, %v1046
    %v1240 = vmax.f32 %v1038, %v1047
    %v1241 = vmax.f32 %v1039, %v1048
    %v1242 = vmax.f32 %v1040, %v1049
    %v1243 = vmax.f32 %v1041, %v1050
    %v1244 = vmax.f32 %v1042, %v1051
    %v1245 = vmax.f32 %v1043, %v1052
    %v1246 = vmax.f32 %v1044, %v1053
    %s1247 = scalar_lea.vmem [#allocation2], 384
    %v1248 = vld [vmem:[%s1247] sm:$0xff]
    %v1249 = vld [vmem:[%s1247 + $0x8] sm:$0xff]
    %v1250 = vld [vmem:[%s1247 + $0x10] sm:$0xff]
    %v1251 = vld [vmem:[%s1247 + $0x18] sm:$0xff]
    %v1252 = vld [vmem:[%s1247 + $0x20] sm:$0xff]
    %v1253 = vld [vmem:[%s1247 + $0x28] sm:$0xff]
    %v1254 = vld [vmem:[%s1247 + $0x30] sm:$0xff]
    %v1255 = vld [vmem:[%s1247 + $0x38] sm:$0xff]
    %s1256 = scalar_lea.vmem [#allocation5], 2304
    %v1257 = vld [vmem:[%s1256] sm:$0xff]
    %v1258 = vld [vmem:[%s1256 + $0x8] sm:$0xff]
    %v1259 = vld [vmem:[%s1256 + $0x10] sm:$0xff]
    %v1260 = vld [vmem:[%s1256 + $0x18] sm:$0xff]
    %v1261 = vld [vmem:[%s1256 + $0x20] sm:$0xff]
    %v1262 = vld [vmem:[%s1256 + $0x28] sm:$0xff]
    %v1263 = vld [vmem:[%s1256 + $0x30] sm:$0xff]
    %v1264 = vld [vmem:[%s1256 + $0x38] sm:$0xff]
    %v1265 = vld [vmem:[%s1256 + $0x40] sm:$0xff]
    %v1266 = vld [vmem:[%s1256 + $0x48] sm:$0xff]
    %v1267 = vld [vmem:[%s1256 + $0x50] sm:$0xff]
    %v1268 = vld [vmem:[%s1256 + $0x58] sm:$0xff]
    %v1269 = vld [vmem:[%s1256 + $0x60] sm:$0xff]
    %v1270 = vld [vmem:[%s1256 + $0x68] sm:$0xff]
    %v1271 = vld [vmem:[%s1256 + $0x70] sm:$0xff]
    %v1272 = vld [vmem:[%s1256 + $0x78] sm:$0xff]
    %v1273 = vld [vmem:[%s1256 + $0x80] sm:$0xff]
    %v1274 = vld [vmem:[%s1256 + $0x88] sm:$0xff]
    %v1275 = vld [vmem:[%s1256 + $0x90] sm:$0xff]
    %v1276 = vld [vmem:[%s1256 + $0x98] sm:$0xff]
    %v1277 = vld [vmem:[%s1256 + $0xa0] sm:$0xff]
    %v1278 = vld [vmem:[%s1256 + $0xa8] sm:$0xff]
    %v1279 = vld [vmem:[%s1256 + $0xb0] sm:$0xff]
    %v1280 = vld [vmem:[%s1256 + $0xb8] sm:$0xff]
    %v1281 = vld [vmem:[%s1256 + $0xc0] sm:$0xff]
    %v1282 = vld [vmem:[%s1256 + $0xc8] sm:$0xff]
    %v1283 = vld [vmem:[%s1256 + $0xd0] sm:$0xff]
    %v1284 = vld [vmem:[%s1256 + $0xd8] sm:$0xff]
    %v1285 = vld [vmem:[%s1256 + $0xe0] sm:$0xff]
    %v1286 = vld [vmem:[%s1256 + $0xe8] sm:$0xff]
    %v1287 = vld [vmem:[%s1256 + $0xf0] sm:$0xff]
    %v1288 = vld [vmem:[%s1256 + $0xf8] sm:$0xff]
    %v1289 = vld [vmem:[%s1256 + $0x100] sm:$0xff]
    %v1290 = vld [vmem:[%s1256 + $0x108] sm:$0xff]
    %v1291 = vld [vmem:[%s1256 + $0x110] sm:$0xff]
    %v1292 = vld [vmem:[%s1256 + $0x118] sm:$0xff]
    %v1293 = vld [vmem:[%s1256 + $0x120] sm:$0xff]
    %v1294 = vld [vmem:[%s1256 + $0x128] sm:$0xff]
    %v1295 = vld [vmem:[%s1256 + $0x130] sm:$0xff]
    %v1296 = vld [vmem:[%s1256 + $0x138] sm:$0xff]
    %v1297 = vld [vmem:[%s1256 + $0x140] sm:$0xff]
    %v1298 = vld [vmem:[%s1256 + $0x148] sm:$0xff]
    %v1299 = vld [vmem:[%s1256 + $0x150] sm:$0xff]
    %v1300 = vld [vmem:[%s1256 + $0x158] sm:$0xff]
    %v1301 = vld [vmem:[%s1256 + $0x160] sm:$0xff]
    %v1302 = vld [vmem:[%s1256 + $0x168] sm:$0xff]
    %v1303 = vld [vmem:[%s1256 + $0x170] sm:$0xff]
    %v1304 = vld [vmem:[%s1256 + $0x178] sm:$0xff]
    %v1306 = vsel %vm174, %v1249, 0
    %v1309 = vsel %vm174, %v1251, 0
    %v1312 = vsel %vm174, %v1253, 0
    %v1315 = vsel %vm174, %v1255, 0
    %1317 = vmatpush.msra.mxu0 %v1287
    %1318 = vmatpush.msra.mxu0 %v1285
    %1319 = vmatpush.msra.mxu0 %v1283
    %1320 = vmatpush.msra.mxu0 %v1281
    %1321 = vmatpush.msra.mxu0 %v1279
    %1322 = vmatpush.msra.mxu0 %v1277
    %1323 = vmatpush.msra.mxu0 %v1275
    %1324 = vmatpush.msra.mxu0 %v1273
    %1325 = vmatpush.msra.mxu0 %v1271
    %1326 = vmatpush.msra.mxu0 %v1269
    %1327 = vmatpush.msra.mxu0 %v1267
    %1328 = vmatpush.msra.mxu0 %v1265
    %1329 = vmatpush.msra.mxu0 %v1263
    %1330 = vmatpush.msra.mxu0 %v1261
    %1331 = vmatpush.msra.mxu0 %v1259
    %1332 = vmatpush.msra.mxu0 %v1257
    %1333 = vmatmul.f32.gmra.mxu0 %v1248
    %v1334 = vpop.f32.mrf.mxu0
    %v1335 = vadd.f32 0.0, %v1334
    %1336 = vmatmul.f32.gmra.mxu0 %v1250
    %v1337 = vpop.f32.mrf.mxu0
    %v1338 = vadd.f32 0.0, %v1337
    %1339 = vmatmul.f32.gmra.mxu0 %v1252
    %v1340 = vpop.f32.mrf.mxu0
    %v1341 = vadd.f32 0.0, %v1340
    %1342 = vmatmul.f32.gmra.mxu0 %v1254
    %v1343 = vpop.f32.mrf.mxu0
    %v1344 = vadd.f32 0.0, %v1343
    %1345 = vdwg.mxu0
    %1346 = vmatpush.msra.mxu0 0.0
    %1347 = vmatpush.msra.mxu0 0.0
    %1348 = vmatpush.msra.mxu0 0.0
    %1349 = vmatpush.msra.mxu0 0.0
    %1350 = vmatpush.msra.mxu0 0.0
    %1351 = vmatpush.msra.mxu0 0.0
    %1352 = vmatpush.msra.mxu0 0.0
    %1353 = vmatpush.msra.mxu0 0.0
    %1354 = vmatpush.msra.mxu0 %v1303
    %1355 = vmatpush.msra.mxu0 %v1301
    %1356 = vmatpush.msra.mxu0 %v1299
    %1357 = vmatpush.msra.mxu0 %v1297
    %1358 = vmatpush.msra.mxu0 %v1295
    %1359 = vmatpush.msra.mxu0 %v1293
    %1360 = vmatpush.msra.mxu0 %v1291
    %1361 = vmatpush.msra.mxu0 %v1289
    %1362 = vmatmul.f32.gmra.mxu0 %v1306
    %v1363 = vpop.f32.mrf.mxu0
    %v1364 = vadd.f32 %v1335, %v1363
    %1365 = vmatmul.f32.gmra.mxu0 %v1309
    %v1366 = vpop.f32.mrf.mxu0
    %v1367 = vadd.f32 %v1338, %v1366
    %1368 = vmatmul.f32.gmra.mxu0 %v1312
    %v1369 = vpop.f32.mrf.mxu0
    %v1370 = vadd.f32 %v1341, %v1369
    %1371 = vmatmul.f32.gmra.mxu0 %v1315
    %v1372 = vpop.f32.mrf.mxu0
    %v1373 = vadd.f32 %v1344, %v1372
    %1374 = vdwg.mxu0
    %1375 = vmatpush.msra.mxu0 %v1288
    %1376 = vmatpush.msra.mxu0 %v1286
    %1377 = vmatpush.msra.mxu0 %v1284
    %1378 = vmatpush.msra.mxu0 %v1282
    %1379 = vmatpush.msra.mxu0 %v1280
    %1380 = vmatpush.msra.mxu0 %v1278
    %1381 = vmatpush.msra.mxu0 %v1276
    %1382 = vmatpush.msra.mxu0 %v1274
    %1383 = vmatpush.msra.mxu0 %v1272
    %1384 = vmatpush.msra.mxu0 %v1270
    %1385 = vmatpush.msra.mxu0 %v1268
    %1386 = vmatpush.msra.mxu0 %v1266
    %1387 = vmatpush.msra.mxu0 %v1264
    %1388 = vmatpush.msra.mxu0 %v1262
    %1389 = vmatpush.msra.mxu0 %v1260
    %1390 = vmatpush.msra.mxu0 %v1258
    %1391 = vmatmul.f32.gmra.mxu0 %v1248
    %v1392 = vpop.f32.mrf.mxu0
    %v1393 = vadd.f32 0.0, %v1392
    %1394 = vmatmul.f32.gmra.mxu0 %v1250
    %v1395 = vpop.f32.mrf.mxu0
    %v1396 = vadd.f32 0.0, %v1395
    %1397 = vmatmul.f32.gmra.mxu0 %v1252
    %v1398 = vpop.f32.mrf.mxu0
    %v1399 = vadd.f32 0.0, %v1398
    %1400 = vmatmul.f32.gmra.mxu0 %v1254
    %v1401 = vpop.f32.mrf.mxu0
    %v1402 = vadd.f32 0.0, %v1401
    %1403 = vdwg.mxu0
    %1404 = vmatpush.msra.mxu0 0.0
    %1405 = vmatpush.msra.mxu0 0.0
    %1406 = vmatpush.msra.mxu0 0.0
    %1407 = vmatpush.msra.mxu0 0.0
    %1408 = vmatpush.msra.mxu0 0.0
    %1409 = vmatpush.msra.mxu0 0.0
    %1410 = vmatpush.msra.mxu0 0.0
    %1411 = vmatpush.msra.mxu0 0.0
    %1412 = vmatpush.msra.mxu0 %v1304
    %1413 = vmatpush.msra.mxu0 %v1302
    %1414 = vmatpush.msra.mxu0 %v1300
    %1415 = vmatpush.msra.mxu0 %v1298
    %1416 = vmatpush.msra.mxu0 %v1296
    %1417 = vmatpush.msra.mxu0 %v1294
    %1418 = vmatpush.msra.mxu0 %v1292
    %1419 = vmatpush.msra.mxu0 %v1290
    %1420 = vmatmul.f32.gmra.mxu0 %v1306
    %v1421 = vpop.f32.mrf.mxu0
    %v1422 = vadd.f32 %v1393, %v1421
    %1423 = vmatmul.f32.gmra.mxu0 %v1309
    %v1424 = vpop.f32.mrf.mxu0
    %v1425 = vadd.f32 %v1396, %v1424
    %1426 = vmatmul.f32.gmra.mxu0 %v1312
    %v1427 = vpop.f32.mrf.mxu0
    %v1428 = vadd.f32 %v1399, %v1427
    %1429 = vmatmul.f32.gmra.mxu0 %v1315
    %v1430 = vpop.f32.mrf.mxu0
    %v1431 = vadd.f32 %v1402, %v1430
    %1432 = vdwg.mxu0
    %v1433 = vadd.f32 %v1231, %v1364
    %v1434 = vadd.f32 %v1232, %v1422
    %v1435 = vadd.f32 %v1233, %v1367
    %v1436 = vadd.f32 %v1234, %v1425
    %v1437 = vadd.f32 %v1235, %v1370
    %v1438 = vadd.f32 %v1236, %v1428
    %v1439 = vadd.f32 %v1237, %v1373
    %v1440 = vadd.f32 %v1238, %v1431
    %v1441 = vmax.f32 %v1239, %v1248
    %v1442 = vmax.f32 %v1240, %v1249
    %v1443 = vmax.f32 %v1241, %v1250
    %v1444 = vmax.f32 %v1242, %v1251
    %v1445 = vmax.f32 %v1243, %v1252
    %v1446 = vmax.f32 %v1244, %v1253
    %v1447 = vmax.f32 %v1245, %v1254
    %v1448 = vmax.f32 %v1246, %v1255
    %s1449 = scalar_lea.vmem [#allocation2], 448
    %v1450 = vld [vmem:[%s1449] sm:$0xff]
    %v1451 = vld [vmem:[%s1449 + $0x8] sm:$0xff]
    %v1452 = vld [vmem:[%s1449 + $0x10] sm:$0xff]
    %v1453 = vld [vmem:[%s1449 + $0x18] sm:$0xff]
    %v1454 = vld [vmem:[%s1449 + $0x20] sm:$0xff]
    %v1455 = vld [vmem:[%s1449 + $0x28] sm:$0xff]
    %v1456 = vld [vmem:[%s1449 + $0x30] sm:$0xff]
    %v1457 = vld [vmem:[%s1449 + $0x38] sm:$0xff]
    %s1458 = scalar_lea.vmem [#allocation5], 2688
    %v1459 = vld [vmem:[%s1458] sm:$0xff]
    %v1460 = vld [vmem:[%s1458 + $0x8] sm:$0xff]
    %v1461 = vld [vmem:[%s1458 + $0x10] sm:$0xff]
    %v1462 = vld [vmem:[%s1458 + $0x18] sm:$0xff]
    %v1463 = vld [vmem:[%s1458 + $0x20] sm:$0xff]
    %v1464 = vld [vmem:[%s1458 + $0x28] sm:$0xff]
    %v1465 = vld [vmem:[%s1458 + $0x30] sm:$0xff]
    %v1466 = vld [vmem:[%s1458 + $0x38] sm:$0xff]
    %v1467 = vld [vmem:[%s1458 + $0x40] sm:$0xff]
    %v1468 = vld [vmem:[%s1458 + $0x48] sm:$0xff]
    %v1469 = vld [vmem:[%s1458 + $0x50] sm:$0xff]
    %v1470 = vld [vmem:[%s1458 + $0x58] sm:$0xff]
    %v1471 = vld [vmem:[%s1458 + $0x60] sm:$0xff]
    %v1472 = vld [vmem:[%s1458 + $0x68] sm:$0xff]
    %v1473 = vld [vmem:[%s1458 + $0x70] sm:$0xff]
    %v1474 = vld [vmem:[%s1458 + $0x78] sm:$0xff]
    %v1475 = vld [vmem:[%s1458 + $0x80] sm:$0xff]
    %v1476 = vld [vmem:[%s1458 + $0x88] sm:$0xff]
    %v1477 = vld [vmem:[%s1458 + $0x90] sm:$0xff]
    %v1478 = vld [vmem:[%s1458 + $0x98] sm:$0xff]
    %v1479 = vld [vmem:[%s1458 + $0xa0] sm:$0xff]
    %v1480 = vld [vmem:[%s1458 + $0xa8] sm:$0xff]
    %v1481 = vld [vmem:[%s1458 + $0xb0] sm:$0xff]
    %v1482 = vld [vmem:[%s1458 + $0xb8] sm:$0xff]
    %v1483 = vld [vmem:[%s1458 + $0xc0] sm:$0xff]
    %v1484 = vld [vmem:[%s1458 + $0xc8] sm:$0xff]
    %v1485 = vld [vmem:[%s1458 + $0xd0] sm:$0xff]
    %v1486 = vld [vmem:[%s1458 + $0xd8] sm:$0xff]
    %v1487 = vld [vmem:[%s1458 + $0xe0] sm:$0xff]
    %v1488 = vld [vmem:[%s1458 + $0xe8] sm:$0xff]
    %v1489 = vld [vmem:[%s1458 + $0xf0] sm:$0xff]
    %v1490 = vld [vmem:[%s1458 + $0xf8] sm:$0xff]
    %v1491 = vld [vmem:[%s1458 + $0x100] sm:$0xff]
    %v1492 = vld [vmem:[%s1458 + $0x108] sm:$0xff]
    %v1493 = vld [vmem:[%s1458 + $0x110] sm:$0xff]
    %v1494 = vld [vmem:[%s1458 + $0x118] sm:$0xff]
    %v1495 = vld [vmem:[%s1458 + $0x120] sm:$0xff]
    %v1496 = vld [vmem:[%s1458 + $0x128] sm:$0xff]
    %v1497 = vld [vmem:[%s1458 + $0x130] sm:$0xff]
    %v1498 = vld [vmem:[%s1458 + $0x138] sm:$0xff]
    %v1499 = vld [vmem:[%s1458 + $0x140] sm:$0xff]
    %v1500 = vld [vmem:[%s1458 + $0x148] sm:$0xff]
    %v1501 = vld [vmem:[%s1458 + $0x150] sm:$0xff]
    %v1502 = vld [vmem:[%s1458 + $0x158] sm:$0xff]
    %v1503 = vld [vmem:[%s1458 + $0x160] sm:$0xff]
    %v1504 = vld [vmem:[%s1458 + $0x168] sm:$0xff]
    %v1505 = vld [vmem:[%s1458 + $0x170] sm:$0xff]
    %v1506 = vld [vmem:[%s1458 + $0x178] sm:$0xff]
    %v1508 = vsel %vm174, %v1451, 0
    %v1511 = vsel %vm174, %v1453, 0
    %v1514 = vsel %vm174, %v1455, 0
    %v1517 = vsel %vm174, %v1457, 0
    %1519 = vmatpush.msra.mxu0 %v1489
    %1520 = vmatpush.msra.mxu0 %v1487
    %1521 = vmatpush.msra.mxu0 %v1485
    %1522 = vmatpush.msra.mxu0 %v1483
    %1523 = vmatpush.msra.mxu0 %v1481
    %1524 = vmatpush.msra.mxu0 %v1479
    %1525 = vmatpush.msra.mxu0 %v1477
    %1526 = vmatpush.msra.mxu0 %v1475
    %1527 = vmatpush.msra.mxu0 %v1473
    %1528 = vmatpush.msra.mxu0 %v1471
    %1529 = vmatpush.msra.mxu0 %v1469
    %1530 = vmatpush.msra.mxu0 %v1467
    %1531 = vmatpush.msra.mxu0 %v1465
    %1532 = vmatpush.msra.mxu0 %v1463
    %1533 = vmatpush.msra.mxu0 %v1461
    %1534 = vmatpush.msra.mxu0 %v1459
    %1535 = vmatmul.f32.gmra.mxu0 %v1450
    %v1536 = vpop.f32.mrf.mxu0
    %v1537 = vadd.f32 0.0, %v1536
    %1538 = vmatmul.f32.gmra.mxu0 %v1452
    %v1539 = vpop.f32.mrf.mxu0
    %v1540 = vadd.f32 0.0, %v1539
    %1541 = vmatmul.f32.gmra.mxu0 %v1454
    %v1542 = vpop.f32.mrf.mxu0
    %v1543 = vadd.f32 0.0, %v1542
    %1544 = vmatmul.f32.gmra.mxu0 %v1456
    %v1545 = vpop.f32.mrf.mxu0
    %v1546 = vadd.f32 0.0, %v1545
    %1547 = vdwg.mxu0
    %1548 = vmatpush.msra.mxu0 0.0
    %1549 = vmatpush.msra.mxu0 0.0
    %1550 = vmatpush.msra.mxu0 0.0
    %1551 = vmatpush.msra.mxu0 0.0
    %1552 = vmatpush.msra.mxu0 0.0
    %1553 = vmatpush.msra.mxu0 0.0
    %1554 = vmatpush.msra.mxu0 0.0
    %1555 = vmatpush.msra.mxu0 0.0
    %1556 = vmatpush.msra.mxu0 %v1505
    %1557 = vmatpush.msra.mxu0 %v1503
    %1558 = vmatpush.msra.mxu0 %v1501
    %1559 = vmatpush.msra.mxu0 %v1499
    %1560 = vmatpush.msra.mxu0 %v1497
    %1561 = vmatpush.msra.mxu0 %v1495
    %1562 = vmatpush.msra.mxu0 %v1493
    %1563 = vmatpush.msra.mxu0 %v1491
    %1564 = vmatmul.f32.gmra.mxu0 %v1508
    %v1565 = vpop.f32.mrf.mxu0
    %v1566 = vadd.f32 %v1537, %v1565
    %1567 = vmatmul.f32.gmra.mxu0 %v1511
    %v1568 = vpop.f32.mrf.mxu0
    %v1569 = vadd.f32 %v1540, %v1568
    %1570 = vmatmul.f32.gmra.mxu0 %v1514
    %v1571 = vpop.f32.mrf.mxu0
    %v1572 = vadd.f32 %v1543, %v1571
    %1573 = vmatmul.f32.gmra.mxu0 %v1517
    %v1574 = vpop.f32.mrf.mxu0
    %v1575 = vadd.f32 %v1546, %v1574
    %1576 = vdwg.mxu0
    %1577 = vmatpush.msra.mxu0 %v1490
    %1578 = vmatpush.msra.mxu0 %v1488
    %1579 = vmatpush.msra.mxu0 %v1486
    %1580 = vmatpush.msra.mxu0 %v1484
    %1581 = vmatpush.msra.mxu0 %v1482
    %1582 = vmatpush.msra.mxu0 %v1480
    %1583 = vmatpush.msra.mxu0 %v1478
    %1584 = vmatpush.msra.mxu0 %v1476
    %1585 = vmatpush.msra.mxu0 %v1474
    %1586 = vmatpush.msra.mxu0 %v1472
    %1587 = vmatpush.msra.mxu0 %v1470
    %1588 = vmatpush.msra.mxu0 %v1468
    %1589 = vmatpush.msra.mxu0 %v1466
    %1590 = vmatpush.msra.mxu0 %v1464
    %1591 = vmatpush.msra.mxu0 %v1462
    %1592 = vmatpush.msra.mxu0 %v1460
    %1593 = vmatmul.f32.gmra.mxu0 %v1450
    %v1594 = vpop.f32.mrf.mxu0
    %v1595 = vadd.f32 0.0, %v1594
    %1596 = vmatmul.f32.gmra.mxu0 %v1452
    %v1597 = vpop.f32.mrf.mxu0
    %v1598 = vadd.f32 0.0, %v1597
    %1599 = vmatmul.f32.gmra.mxu0 %v1454
    %v1600 = vpop.f32.mrf.mxu0
    %v1601 = vadd.f32 0.0, %v1600
    %1602 = vmatmul.f32.gmra.mxu0 %v1456
    %v1603 = vpop.f32.mrf.mxu0
    %v1604 = vadd.f32 0.0, %v1603
    %1605 = vdwg.mxu0
    %1606 = vmatpush.msra.mxu0 0.0
    %1607 = vmatpush.msra.mxu0 0.0
    %1608 = vmatpush.msra.mxu0 0.0
    %1609 = vmatpush.msra.mxu0 0.0
    %1610 = vmatpush.msra.mxu0 0.0
    %1611 = vmatpush.msra.mxu0 0.0
    %1612 = vmatpush.msra.mxu0 0.0
    %1613 = vmatpush.msra.mxu0 0.0
    %1614 = vmatpush.msra.mxu0 %v1506
    %1615 = vmatpush.msra.mxu0 %v1504
    %1616 = vmatpush.msra.mxu0 %v1502
    %1617 = vmatpush.msra.mxu0 %v1500
    %1618 = vmatpush.msra.mxu0 %v1498
    %1619 = vmatpush.msra.mxu0 %v1496
    %1620 = vmatpush.msra.mxu0 %v1494
    %1621 = vmatpush.msra.mxu0 %v1492
    %1622 = vmatmul.f32.gmra.mxu0 %v1508
    %v1623 = vpop.f32.mrf.mxu0
    %v1624 = vadd.f32 %v1595, %v1623
    %1625 = vmatmul.f32.gmra.mxu0 %v1511
    %v1626 = vpop.f32.mrf.mxu0
    %v1627 = vadd.f32 %v1598, %v1626
    %1628 = vmatmul.f32.gmra.mxu0 %v1514
    %v1629 = vpop.f32.mrf.mxu0
    %v1630 = vadd.f32 %v1601, %v1629
    %1631 = vmatmul.f32.gmra.mxu0 %v1517
    %v1632 = vpop.f32.mrf.mxu0
    %v1633 = vadd.f32 %v1604, %v1632
    %1634 = vdwg.mxu0
    %v1635 = vadd.f32 %v1433, %v1566
    %v1636 = vadd.f32 %v1434, %v1624
    %v1637 = vadd.f32 %v1435, %v1569
    %v1638 = vadd.f32 %v1436, %v1627
    %v1639 = vadd.f32 %v1437, %v1572
    %v1640 = vadd.f32 %v1438, %v1630
    %v1641 = vadd.f32 %v1439, %v1575
    %v1642 = vadd.f32 %v1440, %v1633
    %v1643 = vmax.f32 %v1441, %v1450
    %v1644 = vmax.f32 %v1442, %v1451
    %v1645 = vmax.f32 %v1443, %v1452
    %v1646 = vmax.f32 %v1444, %v1453
    %v1647 = vmax.f32 %v1445, %v1454
    %v1648 = vmax.f32 %v1446, %v1455
    %v1649 = vmax.f32 %v1447, %v1456
    %v1650 = vmax.f32 %v1448, %v1457
    %s1651 = scalar_lea.vmem [#allocation2], 512
    %v1652 = vld [vmem:[%s1651] sm:$0xff]
    %v1653 = vld [vmem:[%s1651 + $0x8] sm:$0xff]
    %v1654 = vld [vmem:[%s1651 + $0x10] sm:$0xff]
    %v1655 = vld [vmem:[%s1651 + $0x18] sm:$0xff]
    %v1656 = vld [vmem:[%s1651 + $0x20] sm:$0xff]
    %v1657 = vld [vmem:[%s1651 + $0x28] sm:$0xff]
    %v1658 = vld [vmem:[%s1651 + $0x30] sm:$0xff]
    %v1659 = vld [vmem:[%s1651 + $0x38] sm:$0xff]
    %s1660 = scalar_lea.vmem [#allocation5], 3072
    %v1661 = vld [vmem:[%s1660] sm:$0xff]
    %v1662 = vld [vmem:[%s1660 + $0x8] sm:$0xff]
    %v1663 = vld [vmem:[%s1660 + $0x10] sm:$0xff]
    %v1664 = vld [vmem:[%s1660 + $0x18] sm:$0xff]
    %v1665 = vld [vmem:[%s1660 + $0x20] sm:$0xff]
    %v1666 = vld [vmem:[%s1660 + $0x28] sm:$0xff]
    %v1667 = vld [vmem:[%s1660 + $0x30] sm:$0xff]
    %v1668 = vld [vmem:[%s1660 + $0x38] sm:$0xff]
    %v1669 = vld [vmem:[%s1660 + $0x40] sm:$0xff]
    %v1670 = vld [vmem:[%s1660 + $0x48] sm:$0xff]
    %v1671 = vld [vmem:[%s1660 + $0x50] sm:$0xff]
    %v1672 = vld [vmem:[%s1660 + $0x58] sm:$0xff]
    %v1673 = vld [vmem:[%s1660 + $0x60] sm:$0xff]
    %v1674 = vld [vmem:[%s1660 + $0x68] sm:$0xff]
    %v1675 = vld [vmem:[%s1660 + $0x70] sm:$0xff]
    %v1676 = vld [vmem:[%s1660 + $0x78] sm:$0xff]
    %v1677 = vld [vmem:[%s1660 + $0x80] sm:$0xff]
    %v1678 = vld [vmem:[%s1660 + $0x88] sm:$0xff]
    %v1679 = vld [vmem:[%s1660 + $0x90] sm:$0xff]
    %v1680 = vld [vmem:[%s1660 + $0x98] sm:$0xff]
    %v1681 = vld [vmem:[%s1660 + $0xa0] sm:$0xff]
    %v1682 = vld [vmem:[%s1660 + $0xa8] sm:$0xff]
    %v1683 = vld [vmem:[%s1660 + $0xb0] sm:$0xff]
    %v1684 = vld [vmem:[%s1660 + $0xb8] sm:$0xff]
    %v1685 = vld [vmem:[%s1660 + $0xc0] sm:$0xff]
    %v1686 = vld [vmem:[%s1660 + $0xc8] sm:$0xff]
    %v1687 = vld [vmem:[%s1660 + $0xd0] sm:$0xff]
    %v1688 = vld [vmem:[%s1660 + $0xd8] sm:$0xff]
    %v1689 = vld [vmem:[%s1660 + $0xe0] sm:$0xff]
    %v1690 = vld [vmem:[%s1660 + $0xe8] sm:$0xff]
    %v1691 = vld [vmem:[%s1660 + $0xf0] sm:$0xff]
    %v1692 = vld [vmem:[%s1660 + $0xf8] sm:$0xff]
    %v1693 = vld [vmem:[%s1660 + $0x100] sm:$0xff]
    %v1694 = vld [vmem:[%s1660 + $0x108] sm:$0xff]
    %v1695 = vld [vmem:[%s1660 + $0x110] sm:$0xff]
    %v1696 = vld [vmem:[%s1660 + $0x118] sm:$0xff]
    %v1697 = vld [vmem:[%s1660 + $0x120] sm:$0xff]
    %v1698 = vld [vmem:[%s1660 + $0x128] sm:$0xff]
    %v1699 = vld [vmem:[%s1660 + $0x130] sm:$0xff]
    %v1700 = vld [vmem:[%s1660 + $0x138] sm:$0xff]
    %v1701 = vld [vmem:[%s1660 + $0x140] sm:$0xff]
    %v1702 = vld [vmem:[%s1660 + $0x148] sm:$0xff]
    %v1703 = vld [vmem:[%s1660 + $0x150] sm:$0xff]
    %v1704 = vld [vmem:[%s1660 + $0x158] sm:$0xff]
    %v1705 = vld [vmem:[%s1660 + $0x160] sm:$0xff]
    %v1706 = vld [vmem:[%s1660 + $0x168] sm:$0xff]
    %v1707 = vld [vmem:[%s1660 + $0x170] sm:$0xff]
    %v1708 = vld [vmem:[%s1660 + $0x178] sm:$0xff]
    %v1710 = vsel %vm174, %v1653, 0
    %v1713 = vsel %vm174, %v1655, 0
    %v1716 = vsel %vm174, %v1657, 0
    %v1719 = vsel %vm174, %v1659, 0
    %1721 = vmatpush.msra.mxu0 %v1691
    %1722 = vmatpush.msra.mxu0 %v1689
    %1723 = vmatpush.msra.mxu0 %v1687
    %1724 = vmatpush.msra.mxu0 %v1685
    %1725 = vmatpush.msra.mxu0 %v1683
    %1726 = vmatpush.msra.mxu0 %v1681
    %1727 = vmatpush.msra.mxu0 %v1679
    %1728 = vmatpush.msra.mxu0 %v1677
    %1729 = vmatpush.msra.mxu0 %v1675
    %1730 = vmatpush.msra.mxu0 %v1673
    %1731 = vmatpush.msra.mxu0 %v1671
    %1732 = vmatpush.msra.mxu0 %v1669
    %1733 = vmatpush.msra.mxu0 %v1667
    %1734 = vmatpush.msra.mxu0 %v1665
    %1735 = vmatpush.msra.mxu0 %v1663
    %1736 = vmatpush.msra.mxu0 %v1661
    %1737 = vmatmul.f32.gmra.mxu0 %v1652
    %v1738 = vpop.f32.mrf.mxu0
    %v1739 = vadd.f32 0.0, %v1738
    %1740 = vmatmul.f32.gmra.mxu0 %v1654
    %v1741 = vpop.f32.mrf.mxu0
    %v1742 = vadd.f32 0.0, %v1741
    %1743 = vmatmul.f32.gmra.mxu0 %v1656
    %v1744 = vpop.f32.mrf.mxu0
    %v1745 = vadd.f32 0.0, %v1744
    %1746 = vmatmul.f32.gmra.mxu0 %v1658
    %v1747 = vpop.f32.mrf.mxu0
    %v1748 = vadd.f32 0.0, %v1747
    %1749 = vdwg.mxu0
    %1750 = vmatpush.msra.mxu0 0.0
    %1751 = vmatpush.msra.mxu0 0.0
    %1752 = vmatpush.msra.mxu0 0.0
    %1753 = vmatpush.msra.mxu0 0.0
    %1754 = vmatpush.msra.mxu0 0.0
    %1755 = vmatpush.msra.mxu0 0.0
    %1756 = vmatpush.msra.mxu0 0.0
    %1757 = vmatpush.msra.mxu0 0.0
    %1758 = vmatpush.msra.mxu0 %v1707
    %1759 = vmatpush.msra.mxu0 %v1705
    %1760 = vmatpush.msra.mxu0 %v1703
    %1761 = vmatpush.msra.mxu0 %v1701
    %1762 = vmatpush.msra.mxu0 %v1699
    %1763 = vmatpush.msra.mxu0 %v1697
    %1764 = vmatpush.msra.mxu0 %v1695
    %1765 = vmatpush.msra.mxu0 %v1693
    %1766 = vmatmul.f32.gmra.mxu0 %v1710
    %v1767 = vpop.f32.mrf.mxu0
    %v1768 = vadd.f32 %v1739, %v1767
    %1769 = vmatmul.f32.gmra.mxu0 %v1713
    %v1770 = vpop.f32.mrf.mxu0
    %v1771 = vadd.f32 %v1742, %v1770
    %1772 = vmatmul.f32.gmra.mxu0 %v1716
    %v1773 = vpop.f32.mrf.mxu0
    %v1774 = vadd.f32 %v1745, %v1773
    %1775 = vmatmul.f32.gmra.mxu0 %v1719
    %v1776 = vpop.f32.mrf.mxu0
    %v1777 = vadd.f32 %v1748, %v1776
    %1778 = vdwg.mxu0
    %1779 = vmatpush.msra.mxu0 %v1692
    %1780 = vmatpush.msra.mxu0 %v1690
    %1781 = vmatpush.msra.mxu0 %v1688
    %1782 = vmatpush.msra.mxu0 %v1686
    %1783 = vmatpush.msra.mxu0 %v1684
    %1784 = vmatpush.msra.mxu0 %v1682
    %1785 = vmatpush.msra.mxu0 %v1680
    %1786 = vmatpush.msra.mxu0 %v1678
    %1787 = vmatpush.msra.mxu0 %v1676
    %1788 = vmatpush.msra.mxu0 %v1674
    %1789 = vmatpush.msra.mxu0 %v1672
    %1790 = vmatpush.msra.mxu0 %v1670
    %1791 = vmatpush.msra.mxu0 %v1668
    %1792 = vmatpush.msra.mxu0 %v1666
    %1793 = vmatpush.msra.mxu0 %v1664
    %1794 = vmatpush.msra.mxu0 %v1662
    %1795 = vmatmul.f32.gmra.mxu0 %v1652
    %v1796 = vpop.f32.mrf.mxu0
    %v1797 = vadd.f32 0.0, %v1796
    %1798 = vmatmul.f32.gmra.mxu0 %v1654
    %v1799 = vpop.f32.mrf.mxu0
    %v1800 = vadd.f32 0.0, %v1799
    %1801 = vmatmul.f32.gmra.mxu0 %v1656
    %v1802 = vpop.f32.mrf.mxu0
    %v1803 = vadd.f32 0.0, %v1802
    %1804 = vmatmul.f32.gmra.mxu0 %v1658
    %v1805 = vpop.f32.mrf.mxu0
    %v1806 = vadd.f32 0.0, %v1805
    %1807 = vdwg.mxu0
    %1808 = vmatpush.msra.mxu0 0.0
    %1809 = vmatpush.msra.mxu0 0.0
    %1810 = vmatpush.msra.mxu0 0.0
    %1811 = vmatpush.msra.mxu0 0.0
    %1812 = vmatpush.msra.mxu0 0.0
    %1813 = vmatpush.msra.mxu0 0.0
    %1814 = vmatpush.msra.mxu0 0.0
    %1815 = vmatpush.msra.mxu0 0.0
    %1816 = vmatpush.msra.mxu0 %v1708
    %1817 = vmatpush.msra.mxu0 %v1706
    %1818 = vmatpush.msra.mxu0 %v1704
    %1819 = vmatpush.msra.mxu0 %v1702
    %1820 = vmatpush.msra.mxu0 %v1700
    %1821 = vmatpush.msra.mxu0 %v1698
    %1822 = vmatpush.msra.mxu0 %v1696
    %1823 = vmatpush.msra.mxu0 %v1694
    %1824 = vmatmul.f32.gmra.mxu0 %v1710
    %v1825 = vpop.f32.mrf.mxu0
    %v1826 = vadd.f32 %v1797, %v1825
    %1827 = vmatmul.f32.gmra.mxu0 %v1713
    %v1828 = vpop.f32.mrf.mxu0
    %v1829 = vadd.f32 %v1800, %v1828
    %1830 = vmatmul.f32.gmra.mxu0 %v1716
    %v1831 = vpop.f32.mrf.mxu0
    %v1832 = vadd.f32 %v1803, %v1831
    %1833 = vmatmul.f32.gmra.mxu0 %v1719
    %v1834 = vpop.f32.mrf.mxu0
    %v1835 = vadd.f32 %v1806, %v1834
    %1836 = vdwg.mxu0
    %v1837 = vadd.f32 %v1635, %v1768
    %v1838 = vadd.f32 %v1636, %v1826
    %v1839 = vadd.f32 %v1637, %v1771
    %v1840 = vadd.f32 %v1638, %v1829
    %v1841 = vadd.f32 %v1639, %v1774
    %v1842 = vadd.f32 %v1640, %v1832
    %v1843 = vadd.f32 %v1641, %v1777
    %v1844 = vadd.f32 %v1642, %v1835
    %v1845 = vmax.f32 %v1643, %v1652
    %v1846 = vmax.f32 %v1644, %v1653
    %v1847 = vmax.f32 %v1645, %v1654
    %v1848 = vmax.f32 %v1646, %v1655
    %v1849 = vmax.f32 %v1647, %v1656
    %v1850 = vmax.f32 %v1648, %v1657
    %v1851 = vmax.f32 %v1649, %v1658
    %v1852 = vmax.f32 %v1650, %v1659
    %v1853 = vld [vmem:[#allocation7] sm:$0x3]
    %v1855 = vperm.slane %v1853, 0
    %v1856 = vperm.slane %v1853, 1
    %v1859 = vadd.f32 %v1837, %v1855
    %v1860 = vadd.f32 %v1838, %v1856
    %v1861 = vadd.f32 %v1839, %v1855
    %v1862 = vadd.f32 %v1840, %v1856
    %v1863 = vadd.f32 %v1841, %v1855
    %v1864 = vadd.f32 %v1842, %v1856
    %v1865 = vadd.f32 %v1843, %v1855
    %v1866 = vadd.f32 %v1844, %v1856
    %v1867 = vmax.f32 %v1859, 0.0
    %v1868 = vmax.f32 %v1860, 0.0
    %v1869 = vmax.f32 %v1861, 0.0
    %v1870 = vmax.f32 %v1862, 0.0
    %v1871 = vmax.f32 %v1863, 0.0
    %v1872 = vmax.f32 %v1864, 0.0
    %v1873 = vmax.f32 %v1865, 0.0
    %v1874 = vmax.f32 %v1866, 0.0
    %1883 = vrot.lane.b32.xlu0 %v1845, 64
    %v1884 = vpop.permute.xlu0 %1883
    %1885 = vrot.lane.b32.xlu0 %v1846, 64
    %v1886 = vpop.permute.xlu0 %1885
    %1887 = vrot.lane.b32.xlu0 %v1847, 64
    %v1888 = vpop.permute.xlu0 %1887
    %1889 = vrot.lane.b32.xlu0 %v1848, 64
    %v1890 = vpop.permute.xlu0 %1889
    %1891 = vrot.lane.b32.xlu0 %v1849, 64
    %v1892 = vpop.permute.xlu0 %1891
    %1893 = vrot.lane.b32.xlu0 %v1850, 64
    %v1894 = vpop.permute.xlu0 %1893
    %1895 = vrot.lane.b32.xlu0 %v1851, 64
    %v1896 = vpop.permute.xlu0 %1895
    %1897 = vrot.lane.b32.xlu0 %v1852, 64
    %v1898 = vpop.permute.xlu0 %1897
    %v1899 = vsel %vm174, %v1884, %v1886
    %v1900 = vsel %vm174, %v1888, %v1890
    %v1901 = vsel %vm174, %v1892, %v1894
    %v1902 = vsel %vm174, %v1896, %v1898
    %v1911 = vsel %vm174, %v1868, %v1884
    %v1912 = vsel %vm174, %v1870, %v1888
    %v1913 = vsel %vm174, %v1872, %v1892
    %v1914 = vsel %vm174, %v1874, %v1896
    %1915 = vst [vmem:[#allocation8] sm:$0xff] %v1867
    %1916 = vst [vmem:[#allocation8 + $0x8] sm:$0xff] %v1911
    %1917 = vst [vmem:[#allocation8 + $0x10] sm:$0xff] %v1899
    %1918 = vst [vmem:[#allocation8 + $0x18] sm:$0xff] %v1869
    %1919 = vst [vmem:[#allocation8 + $0x20] sm:$0xff] %v1912
    %1920 = vst [vmem:[#allocation8 + $0x28] sm:$0xff] %v1900
    %1921 = vst [vmem:[#allocation8 + $0x30] sm:$0xff] %v1871
    %1922 = vst [vmem:[#allocation8 + $0x38] sm:$0xff] %v1913
    %1923 = vst [vmem:[#allocation8 + $0x40] sm:$0xff] %v1901
    %1924 = vst [vmem:[#allocation8 + $0x48] sm:$0xff] %v1873
    %1925 = vst [vmem:[#allocation8 + $0x50] sm:$0xff] %v1914
    %1926 = vst [vmem:[#allocation8 + $0x58] sm:$0xff] %v1902
    // Predicated region
    $region26: #{tpu_custom_call.1} parent=1 // pred_check
      _
    $region27: #{tpu_custom_call.1} parent=1 // pred_check_branch
      %1928 = sbr.rel (0) target = $region29
    $region28: #{tpu_custom_call.1} parent=1 // pred_region
      %1930 = vsyncadd [#allocation4], 0
      %s1931 = sshll.u32 [#allocation8], 4
      %s1932 = int_to_ptr.vmem [resolvable:$true] %s1931
      %s1933 = sshll.u32 %s3, 4
      %s1934 = int_to_ptr.hbm [resolvable:$true] %s1933
      %1939 = dma.vmem_to_hbm [thread:$0]  %s1932, 1536, %s1934, [#allocation4], 384, 384, 24
    $region29: #{tpu_custom_call.1} parent=1 // pred_fallthru
      _
    // Predicated region
    $region30: #{tpu_custom_call.1} parent=1 // pred_check
      _
    $region31: #{tpu_custom_call.1} parent=1 // pred_check_branch
      %1941 = sbr.rel (0) target = $region33
    $region32: #{tpu_custom_call.1} parent=1 // pred_region
      %1943 = dma.done [#allocation4], 1536
    $region33: #{tpu_custom_call.1} parent=1 // pred_fallthru
      _
    %1944 = vsyncpa [#allocation3], 1
    %1945 = vsyncpa [#allocation6], 1
    %1946 = vsyncpa [#allocation4], 1

</llo_original>
